<compile_context>
chip_gen: v6e
topology: v6e:2x2x1
jax: 0.10.0
libtpu: 0.0.40
codegen_flags: <defaults>
</compile_context>

<pallas_src>
from functools import partial
import math

import jax
import jax.numpy as jnp
from jax import lax
from jax.experimental import pallas as pl
from jax.experimental.pallas import tpu as pltpu


# ----------------------------- in-kernel helpers ---------------------------- #

def _build_kv_headmajor(kv, k_scr, v_scr, *, num_heads, mxu_dtype):
    """Split the (Nk, 2C) kv projection into head-major K/V VMEM scratch.

    Column order matches torch's kv.reshape(B, Nk, 2, nh, d): the first C
    columns are K (head-major within C), the next C are V.  Only static lane
    slices + a leading-axis stack are used (cheap layout ops, once per batch).
    """
    _, twoC = kv.shape
    C = twoC // 2
    d = C // num_heads
    kvc = kv.astype(mxu_dtype)
    k_scr[...] = jnp.stack(
        [kvc[:, h * d:(h + 1) * d] for h in range(num_heads)], axis=0)
    v_scr[...] = jnp.stack(
        [kvc[:, C + h * d:C + (h + 1) * d] for h in range(num_heads)], axis=0)


def _attend_project(q_scaled, k_scr, v_scr, proj_w, proj_b, o_ref, *,
                    num_heads, mxu_dtype):
    """Head-batched softmax attention fused with a single output projection.

    q_scaled: (tq, C) f32 with the softmax scale already folded in.
    k_scr/v_scr: VMEM scratch refs, (nh, Nk, d), already in the MXU dtype.
    Writes o_ref[0] = concat_h(softmax(q_h k_h^T) v_h) @ proj_w + proj_b.
    """
    tq, C = q_scaled.shape
    d = C // num_heads
    # Head-major q (nh, tq, d): static lane slices + leading-axis stack only.
    qh = q_scaled.astype(mxu_dtype)
    q_hm = jnp.stack([qh[:, h * d:(h + 1) * d] for h in range(num_heads)], axis=0)
    k_hm = k_scr[...]                                   # (nh, Nk, d)
    v_hm = v_scr[...]
    # Batched q @ k^T: contract last dims, heads on the leading batch axis.
    s = lax.dot_general(q_hm, k_hm, (((2,), (2,)), ((0,), (0,))),
                        preferred_element_type=jnp.float32)           # (nh, tq, Nk)
    m = jnp.max(s, axis=-1, keepdims=True)
    p = jnp.exp(s - m)
    p = p * pl.reciprocal(jnp.sum(p, axis=-1, keepdims=True), approx=True)
    # Batched P @ V.
    o_hm = lax.dot_general(p.astype(mxu_dtype), v_hm, (((2,), (1,)), ((0,), (0,))),
                           preferred_element_type=jnp.float32)        # (nh, tq, d)
    # Re-assemble all heads to lane-dense (tq, C) and do ONE output projection
    # with full contraction depth C (instead of num_heads depth-d matmuls).
    o_flat = jnp.concatenate([o_hm[h] for h in range(num_heads)], axis=-1)
    out = jnp.dot(o_flat.astype(mxu_dtype), proj_w,
                  preferred_element_type=jnp.float32) + proj_b
    # TODO(synk): for C < 128 this (tq, C) store is lane-masked; fold rows into
    # lanes if the store ever becomes the bottleneck (irrelevant for C >= 128).
    o_ref[0] = out.astype(o_ref.dtype)


# ------------------------------- fused kernels ------------------------------ #

def _sr_attn_kernel(x_ref, patch_ref, qw_ref, qb_ref, kvw_ref, kvb_ref,
                    srw_ref, srb_ref, lng_ref, lnb_ref, pw_ref, pb_ref,
                    o_ref, k_scr, v_scr, *, num_heads, scale, eps, mxu_dtype):
    # Build K/V once per batch element (first q tile) into head-major scratch.
    @pl.when(pl.program_id(1) == 0)
    def _build_kv():
        # Strided sr-conv (kernel == stride, non-overlapping) == patches @ W + b.
        xr = jnp.dot(patch_ref[0], srw_ref[...],
                     preferred_element_type=jnp.float32) + srb_ref[...]      # (Nk, C)
        # LayerNorm over channels, f32 statistics (eps matches nn.LayerNorm).
        mean = jnp.mean(xr, axis=-1, keepdims=True)
        var = jnp.mean(jnp.square(xr - mean), axis=-1, keepdims=True)
        xr = (xr - mean) * lax.rsqrt(var + eps)
        xr = xr * lng_ref[...] + lnb_ref[...]
        kv = jnp.dot(xr.astype(mxu_dtype), kvw_ref[...],
                     preferred_element_type=jnp.float32) + kvb_ref[...]      # (Nk, 2C)
        _build_kv_headmajor(kv, k_scr, v_scr,
                            num_heads=num_heads, mxu_dtype=mxu_dtype)

    # q projection for this (batch, q tile); softmax scale folded into q (O(N*C)).
    q = (jnp.dot(x_ref[0].astype(mxu_dtype), qw_ref[...],
                 preferred_element_type=jnp.float32) + qb_ref[...]) * scale
    _attend_project(q, k_scr, v_scr, pw_ref[...], pb_ref[...], o_ref,
                    num_heads=num_heads, mxu_dtype=mxu_dtype)


def _nosr_attn_kernel(xfull_ref, qw_ref, qb_ref, kvw_ref, kvb_ref,
                      pw_ref, pb_ref, o_ref, k_scr, v_scr, *,
                      num_heads, scale, q_tile, mxu_dtype):
    @pl.when(pl.program_id(1) == 0)
    def _build_kv():
        kv = jnp.dot(xfull_ref[0].astype(mxu_dtype), kvw_ref[...],
                     preferred_element_type=jnp.float32) + kvb_ref[...]
        _build_kv_headmajor(kv, k_scr, v_scr,
                            num_heads=num_heads, mxu_dtype=mxu_dtype)

    # q rows sliced out of the already-resident per-batch block: x is DMA'd
    # once per batch instead of twice (tile stream + full copy).
    start = pl.multiple_of(pl.program_id(1) * q_tile, q_tile)
    xq = xfull_ref[0, pl.ds(start, q_tile), :]
    q = (jnp.dot(xq.astype(mxu_dtype), qw_ref[...],
                 preferred_element_type=jnp.float32) + qb_ref[...]) * scale
    _attend_project(q, k_scr, v_scr, pw_ref[...], pb_ref[...], o_ref,
                    num_heads=num_heads, mxu_dtype=mxu_dtype)


# -------------------------------- host wrapper ------------------------------ #

def _pick_q_tile(n, cap=512):
    """Largest multiple-of-8 divisor of n up to `cap` (prefers big tiles)."""
    if n <= cap:
        return n
    for t in range(cap - (cap % 8), 7, -8):
        if n % t == 0:
            return t
    # No multiple-of-8 divisor <= cap: fall back to the full row range (legal
    # since a block dim equal to the array dim is exempt from the (8,128) rule).
    return n


def _padded_bytes(shape, dtype):
    """VMEM bytes of a block after (sublane=8, lane=128) padding."""
    s = list(shape)
    s[-1] = -(-s[-1] // 128) * 128
    if len(s) >= 2:
        s[-2] = -(-s[-2] // 8) * 8
    return math.prod(s) * jnp.dtype(dtype).itemsize


def _vmem_limit_bytes(in_bytes, out_bytes, scratch_bytes):
    # Inputs/outputs are double-buffered by the Pallas pipeline; add 50% + 4 MiB
    # headroom and cap below v7x's 64 MiB physical VMEM.
    total = 2 * in_bytes + 2 * out_bytes + scratch_bytes
    limit = total + total // 2 + (4 << 20)
    return int(min(max(limit, 16 << 20), 48 << 20))


def init_params(key, dim, sr_ratio):
    ks = jax.random.split(key, 6)
    s = 0.02
    p = {
        # stored as (in_features, out_features) so the kernel does x @ w directly
        "q_w": jax.random.normal(ks[0], (dim, dim), jnp.float32) * s,
        "q_b": jnp.zeros((dim,), jnp.float32),            # qkv_bias=False
        "kv_w": jax.random.normal(ks[1], (dim, 2 * dim), jnp.float32) * s,
        "kv_b": jnp.zeros((2 * dim,), jnp.float32),       # qkv_bias=False
        "proj_w": jax.random.normal(ks[2], (dim, dim), jnp.float32) * s,
        "proj_b": jax.random.normal(ks[3], (dim,), jnp.float32) * s,
    }
    if sr_ratio > 1:
        # conv weight in PyTorch layout (C_out, C_in, sr, sr)
        p["sr_w"] = jax.random.normal(ks[4], (dim, dim, sr_ratio, sr_ratio),
                                      jnp.float32) * s
        p["sr_b"] = jax.random.normal(ks[5], (dim,), jnp.float32) * s
        p["ln_g"] = jnp.ones((dim,), jnp.float32)
        p["ln_b"] = jnp.zeros((dim,), jnp.float32)
    return p


def sr_attention(x, H, W, params, num_heads, sr_ratio, *, q_tile=None,
                 mxu_dtype=jnp.bfloat16):
    """Fused SRAttention forward.  x: (B, N, C) with N == H*W."""
    B, N, C = x.shape
    assert N == H * W and C % num_heads == 0
    head_dim = C // num_heads
    scale = head_dim ** -0.5
    f32 = jnp.float32

    tq = q_tile if q_tile is not None else _pick_q_tile(N)
    nqt = N // tq

    # Weights cast once on the host to the MXU dtype; biases / LN stay f32.
    qw = params["q_w"].astype(mxu_dtype)
    kvw = params["kv_w"].astype(mxu_dtype)
    pw = params["proj_w"].astype(mxu_dtype)
    qb2 = params["q_b"].reshape(1, C).astype(f32)
    kvb2 = params["kv_b"].reshape(1, 2 * C).astype(f32)
    pb2 = params["proj_b"].reshape(1, C).astype(f32)

    row_map = lambda b, qi: (b, qi, 0)
    batch_map = lambda b, qi: (b, 0, 0)
    fix_map = lambda b, qi: (0, 0)

    if sr_ratio > 1:
        sr = sr_ratio
        assert H % sr == 0 and W % sr == 0
        Ho, Wo = H // sr, W // sr
        Nk = Ho * Wo
        P = C * sr * sr
        # Non-overlapping patch extraction (pure layout, one XLA pass); patch
        # feature order (c_in, i, j) matches the Conv2d weight flatten.  Cast to
        # the MXU dtype so the extra HBM pass is half width.
        # TODO(synk): express this gather as an in-kernel strided DMA / BlockSpec
        # index_map over (Ho, Wo) windows to avoid the extra HBM pass over x.
        patches = (x.reshape(B, Ho, sr, Wo, sr, C)
                     .transpose(0, 1, 3, 5, 2, 4)
                     .reshape(B, Nk, P)
                     .astype(mxu_dtype))
        srw_flat = params["sr_w"].reshape(C, P).T.astype(mxu_dtype)   # (P, C)
        srb2 = params["sr_b"].reshape(1, C).astype(f32)
        lng2 = params["ln_g"].reshape(1, C).astype(f32)
        lnb2 = params["ln_b"].reshape(1, C).astype(f32)

        kernel = partial(_sr_attn_kernel, num_heads=num_heads, scale=scale,
                         eps=1e-5, mxu_dtype=mxu_dtype)
        entries = [
            ((1, tq, C), row_map, x),            # q row tiles
            ((1, Nk, P), batch_map, patches),    # patches, resident per batch
            ((C, C), fix_map, qw),
            ((1, C), fix_map, qb2),
            ((C, 2 * C), fix_map, kvw),
            ((1, 2 * C), fix_map, kvb2),
            ((P, C), fix_map, srw_flat),
            ((1, C), fix_map, srb2),
            ((1, C), fix_map, lng2),
            ((1, C), fix_map, lnb2),
            ((C, C), fix_map, pw),
            ((1, C), fix_map, pb2),
        ]
    else:
        Nk = N
        kernel = partial(_nosr_attn_kernel, num_heads=num_heads, scale=scale,
                         q_tile=tq, mxu_dtype=mxu_dtype)
        entries = [
            ((1, N, C), batch_map, x),           # single full-x stream per batch
            ((C, C), fix_map, qw),
            ((1, C), fix_map, qb2),
            ((C, 2 * C), fix_map, kvw),
            ((1, 2 * C), fix_map, kvb2),
            ((C, C), fix_map, pw),
            ((1, C), fix_map, pb2),
        ]

    in_specs = [pl.BlockSpec(shape, imap) for shape, imap, _ in entries]
    args = tuple(arr for _, _, arr in entries)
    in_bytes = sum(_padded_bytes(shape, arr.dtype) for shape, _, arr in entries)
    out_block = (1, tq, C)
    out_bytes = _padded_bytes(out_block, x.dtype)
    scratch_bytes = 2 * _padded_bytes((num_heads, Nk, head_dim), mxu_dtype)

    return pl.pallas_call(
        kernel,
        out_shape=jax.ShapeDtypeStruct((B, N, C), x.dtype),
        grid=(B, nqt),
        in_specs=in_specs,
        out_specs=pl.BlockSpec(out_block, row_map),
        scratch_shapes=[pltpu.VMEM((num_heads, Nk, head_dim), mxu_dtype),  # K
                        pltpu.VMEM((num_heads, Nk, head_dim), mxu_dtype)], # V
        compiler_params=pltpu.CompilerParams(
            dimension_semantics=("parallel", "arbitrary"),
            vmem_limit_bytes=_vmem_limit_bytes(in_bytes, out_bytes,
                                               scratch_bytes)),
    )(*args)


# -------------------------- pure-JAX reference (check) ----------------------- #

def sr_attention_ref(x, H, W, params, num_heads, sr_ratio):
    B, N, C = x.shape
    d = C // num_heads
    scale = d ** -0.5
    q = (x @ params["q_w"] + params["q_b"]).reshape(B, N, num_heads, d)
    q = q.transpose(0, 2, 1, 3)
    if sr_ratio > 1:
        sr = sr_ratio
        patches = (x.reshape(B, H // sr, sr, W // sr, sr, C)
                     .transpose(0, 1, 3, 5, 2, 4)
                     .reshape(B, -1, C * sr * sr))
        x_ = patches @ params["sr_w"].reshape(C, -1).T + params["sr_b"]
        mean = x_.mean(-1, keepdims=True)
        var = ((x_ - mean) ** 2).mean(-1, keepdims=True)
        x_ = (x_ - mean) / jnp.sqrt(var + 1e-5) * params["ln_g"] + params["ln_b"]
    else:
        x_ = x
    Nk = x_.shape[1]
    kv = (x_ @ params["kv_w"] + params["kv_b"]).reshape(B, Nk, 2, num_heads, d)
    kv = kv.transpose(2, 0, 3, 1, 4)
    k, v = kv[0], kv[1]
    attn = jax.nn.softmax((q @ k.transpose(0, 1, 3, 2)) * scale, axis=-1)
    out = (attn @ v).transpose(0, 2, 1, 3).reshape(B, N, C)
    return out @ params["proj_w"] + params["proj_b"]


# ---------------------------------- main ------------------------------------ #

if __name__ == "__main__":
    B, C, H, W = 2, 32, 8, 8
    num_heads, sr_ratio = 8, 2
    N = H * W

    key = jax.random.PRNGKey(0)
    kx, kp = jax.random.split(key)
    x = jax.random.normal(kx, (B, N, C), jnp.float32)
    params = init_params(kp, C, sr_ratio)

    # SR path (sr_ratio=2), forced to two q tiles to exercise KV-scratch reuse.
    out = sr_attention(x, H, W, params, num_heads, sr_ratio, q_tile=32)
    jax.block_until_ready(out)
    assert out.shape == (B, N, C) and out.dtype == jnp.float32
    assert bool(jnp.all(jnp.isfinite(out)))
    ref = sr_attention_ref(x, H, W, params, num_heads, sr_ratio)
    max_err = float(jnp.max(jnp.abs(out - ref)))
    assert max_err < 2e-2, f"SR path mismatch vs reference: {max_err}"

    # No-SR path (sr_ratio=1), also multi-tile.
    params1 = init_params(jax.random.PRNGKey(1), C, 1)
    out1 = sr_attention(x, H, W, params1, num_heads, 1, q_tile=32)
    jax.block_until_ready(out1)
    ref1 = sr_attention_ref(x, H, W, params1, num_heads, 1)
    max_err1 = float(jnp.max(jnp.abs(out1 - ref1)))
    assert max_err1 < 2e-2, f"no-SR path mismatch vs reference: {max_err1}"

    print("KERNEL_OK")
</pallas_src>

<mosaic_0001>
module attributes {stable_mosaic.version = 11 : i64} {
  func.func @_sr_attn_kernel(%arg0: i32, %arg1: i32, %arg2: memref<1x32x32xf32, #tpu.memory_space<vmem>>, %arg3: memref<1x16x128xbf16, #tpu.memory_space<vmem>>, %arg4: memref<32x32xbf16, #tpu.memory_space<vmem>>, %arg5: memref<1x32xf32, #tpu.memory_space<vmem>>, %arg6: memref<32x64xbf16, #tpu.memory_space<vmem>>, %arg7: memref<1x64xf32, #tpu.memory_space<vmem>>, %arg8: memref<128x32xbf16, #tpu.memory_space<vmem>>, %arg9: memref<1x32xf32, #tpu.memory_space<vmem>>, %arg10: memref<1x32xf32, #tpu.memory_space<vmem>>, %arg11: memref<1x32xf32, #tpu.memory_space<vmem>>, %arg12: memref<32x32xbf16, #tpu.memory_space<vmem>>, %arg13: memref<1x32xf32, #tpu.memory_space<vmem>>, %arg14: memref<1x32x32xf32, #tpu.memory_space<vmem>>, %arg15: memref<8x16x4xbf16, #tpu.memory_space<vmem>>, %arg16: memref<8x16x4xbf16, #tpu.memory_space<vmem>>) attributes {dimension_semantics = [#tpu.dimension_semantics<parallel>, #tpu.dimension_semantics<arbitrary>], iteration_bounds = array<i64: 2, 2>, scalar_prefetch = 0 : i64, scratch_operands = 2 : i64, tpu.core_type = #tpu.core_type<tc>, window_params = [{transform_indices = @transform_0, window_bounds = array<i64: 1, 32, 32>}, {transform_indices = @transform_1, window_bounds = array<i64: 1, 16, 128>}, {pipeline_mode = #tpu.pipeline_mode<synchronous>, transform_indices = @transform_2, window_bounds = array<i64: 32, 32>}, {pipeline_mode = #tpu.pipeline_mode<synchronous>, transform_indices = @transform_3, window_bounds = array<i64: 1, 32>}, {pipeline_mode = #tpu.pipeline_mode<synchronous>, transform_indices = @transform_4, window_bounds = array<i64: 32, 64>}, {pipeline_mode = #tpu.pipeline_mode<synchronous>, transform_indices = @transform_5, window_bounds = array<i64: 1, 64>}, {pipeline_mode = #tpu.pipeline_mode<synchronous>, transform_indices = @transform_6, window_bounds = array<i64: 128, 32>}, {pipeline_mode = #tpu.pipeline_mode<synchronous>, transform_indices = @transform_7, window_bounds = array<i64: 1, 32>}, {pipeline_mode = #tpu.pipeline_mode<synchronous>, transform_indices = @transform_8, window_bounds = array<i64: 1, 32>}, {pipeline_mode = #tpu.pipeline_mode<synchronous>, transform_indices = @transform_9, window_bounds = array<i64: 1, 32>}, {pipeline_mode = #tpu.pipeline_mode<synchronous>, transform_indices = @transform_10, window_bounds = array<i64: 32, 32>}, {pipeline_mode = #tpu.pipeline_mode<synchronous>, transform_indices = @transform_11, window_bounds = array<i64: 1, 32>}, {transform_indices = @transform_12, window_bounds = array<i64: 1, 32, 32>}]} {
    %c0_i32 = arith.constant 0 : i32
    %0 = arith.cmpi eq, %arg1, %c0_i32 : i32
    %1 = arith.extui %0 : i1 to i32
    %c0_i32_0 = arith.constant 0 : i32
    %2 = arith.cmpi ne, %1, %c0_i32_0 : i32
    scf.if %2 {
      %c0_26 = arith.constant 0 : index
      %c0_27 = arith.constant 0 : index
      %c0_28 = arith.constant 0 : index
      %72 = vector.load %arg3[%c0_26, %c0_27, %c0_28] : memref<1x16x128xbf16, #tpu.memory_space<vmem>>, vector<1x16x128xbf16>
      %73 = vector.shape_cast %72 : vector<1x16x128xbf16> to vector<16x128xbf16>
      %c0_29 = arith.constant 0 : index
      %c0_30 = arith.constant 0 : index
      %74 = vector.load %arg8[%c0_29, %c0_30] : memref<128x32xbf16, #tpu.memory_space<vmem>>, vector<128x32xbf16>
      %cst_31 = arith.constant dense<0.000000e+00> : vector<16x32xf32>
      %75 = tpu.matmul %73, %74, %cst_31 {dimension_numbers = #tpu.dot_dimension_numbers<[1], [0], [0], [1], [0, 0, 1, 1], [], []>} : vector<16x128xbf16>, vector<128x32xbf16>, vector<16x32xf32> -> vector<16x32xf32>
      %c0_32 = arith.constant 0 : index
      %c0_33 = arith.constant 0 : index
      %76 = vector.load %arg9[%c0_32, %c0_33] : memref<1x32xf32, #tpu.memory_space<vmem>>, vector<1x32xf32>
      %77 = vector.broadcast %76 : vector<1x32xf32> to vector<16x32xf32>
      %78 = arith.addf %75, %77 : vector<16x32xf32>
      %cst_34 = arith.constant dense<0.000000e+00> : vector<16xf32>
      %79 = vector.multi_reduction <add>, %78, %cst_34 [1] : vector<16x32xf32> to vector<16xf32>
      %80 = vector.shape_cast %79 : vector<16xf32> to vector<16x1xf32>
      %cst_35 = arith.constant 3.200000e+01 : f32
      %81 = vector.broadcast %cst_35 : f32 to vector<16x1xf32>
      %82 = arith.divf %80, %81 : vector<16x1xf32>
      %83 = vector.broadcast %82 : vector<16x1xf32> to vector<16x32xf32>
      %84 = arith.subf %78, %83 : vector<16x32xf32>
      %85 = arith.mulf %84, %84 : vector<16x32xf32>
      %cst_36 = arith.constant dense<0.000000e+00> : vector<16xf32>
      %86 = vector.multi_reduction <add>, %85, %cst_36 [1] : vector<16x32xf32> to vector<16xf32>
      %87 = vector.shape_cast %86 : vector<16xf32> to vector<16x1xf32>
      %cst_37 = arith.constant 3.200000e+01 : f32
      %88 = vector.broadcast %cst_37 : f32 to vector<16x1xf32>
      %89 = arith.divf %87, %88 : vector<16x1xf32>
      %90 = vector.broadcast %82 : vector<16x1xf32> to vector<16x32xf32>
      %91 = arith.subf %78, %90 : vector<16x32xf32>
      %cst_38 = arith.constant 9.99999974E-6 : f32
      %92 = vector.broadcast %cst_38 : f32 to vector<16x1xf32>
      %93 = arith.addf %89, %92 : vector<16x1xf32>
      %94 = math.rsqrt %93 : vector<16x1xf32>
      %95 = vector.broadcast %94 : vector<16x1xf32> to vector<16x32xf32>
      %96 = arith.mulf %91, %95 : vector<16x32xf32>
      %c0_39 = arith.constant 0 : index
      %c0_40 = arith.constant 0 : index
      %97 = vector.load %arg10[%c0_39, %c0_40] : memref<1x32xf32, #tpu.memory_space<vmem>>, vector<1x32xf32>
      %98 = vector.broadcast %97 : vector<1x32xf32> to vector<16x32xf32>
      %99 = arith.mulf %96, %98 : vector<16x32xf32>
      %c0_41 = arith.constant 0 : index
      %c0_42 = arith.constant 0 : index
      %100 = vector.load %arg11[%c0_41, %c0_42] : memref<1x32xf32, #tpu.memory_space<vmem>>, vector<1x32xf32>
      %101 = vector.broadcast %100 : vector<1x32xf32> to vector<16x32xf32>
      %102 = arith.addf %99, %101 : vector<16x32xf32>
      %103 = arith.truncf %102 : vector<16x32xf32> to vector<16x32xbf16>
      %c0_43 = arith.constant 0 : index
      %c0_44 = arith.constant 0 : index
      %104 = vector.load %arg6[%c0_43, %c0_44] : memref<32x64xbf16, #tpu.memory_space<vmem>>, vector<32x64xbf16>
      %cst_45 = arith.constant dense<0.000000e+00> : vector<16x64xf32>
      %105 = tpu.matmul %103, %104, %cst_45 {dimension_numbers = #tpu.dot_dimension_numbers<[1], [0], [0], [1], [0, 0, 1, 1], [], []>} : vector<16x32xbf16>, vector<32x64xbf16>, vector<16x64xf32> -> vector<16x64xf32>
      %c0_46 = arith.constant 0 : index
      %c0_47 = arith.constant 0 : index
      %106 = vector.load %arg7[%c0_46, %c0_47] : memref<1x64xf32, #tpu.memory_space<vmem>>, vector<1x64xf32>
      %107 = vector.broadcast %106 : vector<1x64xf32> to vector<16x64xf32>
      %108 = arith.addf %105, %107 : vector<16x64xf32>
      %109 = arith.truncf %108 : vector<16x64xf32> to vector<16x64xbf16>
      %110 = vector.extract_strided_slice %109 {offsets = [0, 0], sizes = [16, 4], strides = [1, 1]} : vector<16x64xbf16> to vector<16x4xbf16>
      %111 = vector.extract_strided_slice %109 {offsets = [0, 4], sizes = [16, 4], strides = [1, 1]} : vector<16x64xbf16> to vector<16x4xbf16>
      %112 = vector.extract_strided_slice %109 {offsets = [0, 8], sizes = [16, 4], strides = [1, 1]} : vector<16x64xbf16> to vector<16x4xbf16>
      %113 = vector.extract_strided_slice %109 {offsets = [0, 12], sizes = [16, 4], strides = [1, 1]} : vector<16x64xbf16> to vector<16x4xbf16>
      %114 = vector.extract_strided_slice %109 {offsets = [0, 16], sizes = [16, 4], strides = [1, 1]} : vector<16x64xbf16> to vector<16x4xbf16>
      %115 = vector.extract_strided_slice %109 {offsets = [0, 20], sizes = [16, 4], strides = [1, 1]} : vector<16x64xbf16> to vector<16x4xbf16>
      %116 = vector.extract_strided_slice %109 {offsets = [0, 24], sizes = [16, 4], strides = [1, 1]} : vector<16x64xbf16> to vector<16x4xbf16>
      %117 = vector.extract_strided_slice %109 {offsets = [0, 28], sizes = [16, 4], strides = [1, 1]} : vector<16x64xbf16> to vector<16x4xbf16>
      %118 = vector.shape_cast %110 : vector<16x4xbf16> to vector<1x16x4xbf16>
      %119 = vector.shape_cast %111 : vector<16x4xbf16> to vector<1x16x4xbf16>
      %120 = vector.shape_cast %112 : vector<16x4xbf16> to vector<1x16x4xbf16>
      %121 = vector.shape_cast %113 : vector<16x4xbf16> to vector<1x16x4xbf16>
      %122 = vector.shape_cast %114 : vector<16x4xbf16> to vector<1x16x4xbf16>
      %123 = vector.shape_cast %115 : vector<16x4xbf16> to vector<1x16x4xbf16>
      %124 = vector.shape_cast %116 : vector<16x4xbf16> to vector<1x16x4xbf16>
      %125 = vector.shape_cast %117 : vector<16x4xbf16> to vector<1x16x4xbf16>
      %126 = tpu.concatenate %118, %119, %120, %121, %122, %123, %124, %125 in 0 : vector<1x16x4xbf16>, vector<1x16x4xbf16>, vector<1x16x4xbf16>, vector<1x16x4xbf16>, vector<1x16x4xbf16>, vector<1x16x4xbf16>, vector<1x16x4xbf16>, vector<1x16x4xbf16> -> vector<8x16x4xbf16>
      %c0_48 = arith.constant 0 : index
      %c0_49 = arith.constant 0 : index
      %c0_50 = arith.constant 0 : index
      %127 = vector.load %arg15[%c0_48, %c0_49, %c0_50] : memref<8x16x4xbf16, #tpu.memory_space<vmem>>, vector<8x16x4xbf16>
      tpu.vector_store %arg15[%c0_48, %c0_49, %c0_50], %126 {strides = array<i32>} : memref<8x16x4xbf16, #tpu.memory_space<vmem>>, vector<8x16x4xbf16>,
      %128 = vector.extract_strided_slice %109 {offsets = [0, 32], sizes = [16, 4], strides = [1, 1]} : vector<16x64xbf16> to vector<16x4xbf16>
      %129 = vector.extract_strided_slice %109 {offsets = [0, 36], sizes = [16, 4], strides = [1, 1]} : vector<16x64xbf16> to vector<16x4xbf16>
      %130 = vector.extract_strided_slice %109 {offsets = [0, 40], sizes = [16, 4], strides = [1, 1]} : vector<16x64xbf16> to vector<16x4xbf16>
      %131 = vector.extract_strided_slice %109 {offsets = [0, 44], sizes = [16, 4], strides = [1, 1]} : vector<16x64xbf16> to vector<16x4xbf16>
      %132 = vector.extract_strided_slice %109 {offsets = [0, 48], sizes = [16, 4], strides = [1, 1]} : vector<16x64xbf16> to vector<16x4xbf16>
      %133 = vector.extract_strided_slice %109 {offsets = [0, 52], sizes = [16, 4], strides = [1, 1]} : vector<16x64xbf16> to vector<16x4xbf16>
      %134 = vector.extract_strided_slice %109 {offsets = [0, 56], sizes = [16, 4], strides = [1, 1]} : vector<16x64xbf16> to vector<16x4xbf16>
      %135 = vector.extract_strided_slice %109 {offsets = [0, 60], sizes = [16, 4], strides = [1, 1]} : vector<16x64xbf16> to vector<16x4xbf16>
      %136 = vector.shape_cast %128 : vector<16x4xbf16> to vector<1x16x4xbf16>
      %137 = vector.shape_cast %129 : vector<16x4xbf16> to vector<1x16x4xbf16>
      %138 = vector.shape_cast %130 : vector<16x4xbf16> to vector<1x16x4xbf16>
      %139 = vector.shape_cast %131 : vector<16x4xbf16> to vector<1x16x4xbf16>
      %140 = vector.shape_cast %132 : vector<16x4xbf16> to vector<1x16x4xbf16>
      %141 = vector.shape_cast %133 : vector<16x4xbf16> to vector<1x16x4xbf16>
      %142 = vector.shape_cast %134 : vector<16x4xbf16> to vector<1x16x4xbf16>
      %143 = vector.shape_cast %135 : vector<16x4xbf16> to vector<1x16x4xbf16>
      %144 = tpu.concatenate %136, %137, %138, %139, %140, %141, %142, %143 in 0 : vector<1x16x4xbf16>, vector<1x16x4xbf16>, vector<1x16x4xbf16>, vector<1x16x4xbf16>, vector<1x16x4xbf16>, vector<1x16x4xbf16>, vector<1x16x4xbf16>, vector<1x16x4xbf16> -> vector<8x16x4xbf16>
      %c0_51 = arith.constant 0 : index
      %c0_52 = arith.constant 0 : index
      %c0_53 = arith.constant 0 : index
      %145 = vector.load %arg16[%c0_51, %c0_52, %c0_53] : memref<8x16x4xbf16, #tpu.memory_space<vmem>>, vector<8x16x4xbf16>
      tpu.vector_store %arg16[%c0_51, %c0_52, %c0_53], %144 {strides = array<i32>} : memref<8x16x4xbf16, #tpu.memory_space<vmem>>, vector<8x16x4xbf16>,
    } else {
    }
    %c0 = arith.constant 0 : index
    %c0_1 = arith.constant 0 : index
    %c0_2 = arith.constant 0 : index
    %3 = vector.load %arg2[%c0, %c0_1, %c0_2] : memref<1x32x32xf32, #tpu.memory_space<vmem>>, vector<1x32x32xf32>
    %4 = vector.shape_cast %3 : vector<1x32x32xf32> to vector<32x32xf32>
    %5 = arith.truncf %4 : vector<32x32xf32> to vector<32x32xbf16>
    %c0_3 = arith.constant 0 : index
    %c0_4 = arith.constant 0 : index
    %6 = vector.load %arg4[%c0_3, %c0_4] : memref<32x32xbf16, #tpu.memory_space<vmem>>, vector<32x32xbf16>
    %cst = arith.constant dense<0.000000e+00> : vector<32x32xf32>
    %7 = tpu.matmul %5, %6, %cst {dimension_numbers = #tpu.dot_dimension_numbers<[1], [0], [0], [1], [0, 0, 1, 1], [], []>} : vector<32x32xbf16>, vector<32x32xbf16>, vector<32x32xf32> -> vector<32x32xf32>
    %c0_5 = arith.constant 0 : index
    %c0_6 = arith.constant 0 : index
    %8 = vector.load %arg5[%c0_5, %c0_6] : memref<1x32xf32, #tpu.memory_space<vmem>>, vector<1x32xf32>
    %9 = vector.broadcast %8 : vector<1x32xf32> to vector<32x32xf32>
    %10 = arith.addf %7, %9 : vector<32x32xf32>
    %cst_7 = arith.constant 5.000000e-01 : f32
    %11 = vector.broadcast %cst_7 : f32 to vector<32x32xf32>
    %12 = arith.mulf %10, %11 : vector<32x32xf32>
    %c0_8 = arith.constant 0 : index
    %c0_9 = arith.constant 0 : index
    %13 = vector.load %arg12[%c0_8, %c0_9] : memref<32x32xbf16, #tpu.memory_space<vmem>>, vector<32x32xbf16>
    %c0_10 = arith.constant 0 : index
    %c0_11 = arith.constant 0 : index
    %14 = vector.load %arg13[%c0_10, %c0_11] : memref<1x32xf32, #tpu.memory_space<vmem>>, vector<1x32xf32>
    %15 = arith.truncf %12 : vector<32x32xf32> to vector<32x32xbf16>
    %16 = vector.extract_strided_slice %15 {offsets = [0, 0], sizes = [32, 4], strides = [1, 1]} : vector<32x32xbf16> to vector<32x4xbf16>
    %17 = vector.extract_strided_slice %15 {offsets = [0, 4], sizes = [32, 4], strides = [1, 1]} : vector<32x32xbf16> to vector<32x4xbf16>
    %18 = vector.extract_strided_slice %15 {offsets = [0, 8], sizes = [32, 4], strides = [1, 1]} : vector<32x32xbf16> to vector<32x4xbf16>
    %19 = vector.extract_strided_slice %15 {offsets = [0, 12], sizes = [32, 4], strides = [1, 1]} : vector<32x32xbf16> to vector<32x4xbf16>
    %20 = vector.extract_strided_slice %15 {offsets = [0, 16], sizes = [32, 4], strides = [1, 1]} : vector<32x32xbf16> to vector<32x4xbf16>
    %21 = vector.extract_strided_slice %15 {offsets = [0, 20], sizes = [32, 4], strides = [1, 1]} : vector<32x32xbf16> to vector<32x4xbf16>
    %22 = vector.extract_strided_slice %15 {offsets = [0, 24], sizes = [32, 4], strides = [1, 1]} : vector<32x32xbf16> to vector<32x4xbf16>
    %23 = vector.extract_strided_slice %15 {offsets = [0, 28], sizes = [32, 4], strides = [1, 1]} : vector<32x32xbf16> to vector<32x4xbf16>
    %24 = vector.shape_cast %16 : vector<32x4xbf16> to vector<1x32x4xbf16>
    %25 = vector.shape_cast %17 : vector<32x4xbf16> to vector<1x32x4xbf16>
    %26 = vector.shape_cast %18 : vector<32x4xbf16> to vector<1x32x4xbf16>
    %27 = vector.shape_cast %19 : vector<32x4xbf16> to vector<1x32x4xbf16>
    %28 = vector.shape_cast %20 : vector<32x4xbf16> to vector<1x32x4xbf16>
    %29 = vector.shape_cast %21 : vector<32x4xbf16> to vector<1x32x4xbf16>
    %30 = vector.shape_cast %22 : vector<32x4xbf16> to vector<1x32x4xbf16>
    %31 = vector.shape_cast %23 : vector<32x4xbf16> to vector<1x32x4xbf16>
    %32 = tpu.concatenate %24, %25, %26, %27, %28, %29, %30, %31 in 0 : vector<1x32x4xbf16>, vector<1x32x4xbf16>, vector<1x32x4xbf16>, vector<1x32x4xbf16>, vector<1x32x4xbf16>, vector<1x32x4xbf16>, vector<1x32x4xbf16>, vector<1x32x4xbf16> -> vector<8x32x4xbf16>
    %c0_12 = arith.constant 0 : index
    %c0_13 = arith.constant 0 : index
    %c0_14 = arith.constant 0 : index
    %33 = vector.load %arg15[%c0_12, %c0_13, %c0_14] : memref<8x16x4xbf16, #tpu.memory_space<vmem>>, vector<8x16x4xbf16>
    %c0_15 = arith.constant 0 : index
    %c0_16 = arith.constant 0 : index
    %c0_17 = arith.constant 0 : index
    %34 = vector.load %arg16[%c0_15, %c0_16, %c0_17] : memref<8x16x4xbf16, #tpu.memory_space<vmem>>, vector<8x16x4xbf16>
    %cst_18 = arith.constant dense<0.000000e+00> : vector<8x32x16xf32>
    %35 = tpu.matmul %32, %33, %cst_18 {dimension_numbers = #tpu.dot_dimension_numbers<[2], [2], [1], [1], [0, 0, 0, 1, 1, 1], [0], [0]>} : vector<8x32x4xbf16>, vector<8x16x4xbf16>, vector<8x32x16xf32> -> vector<8x32x16xf32>
    %cst_19 = arith.constant dense<0xFF800000> : vector<8x32xf32>
    %36 = vector.multi_reduction <maximumf>, %35, %cst_19 [2] : vector<8x32x16xf32> to vector<8x32xf32>
    %37 = vector.shape_cast %36 : vector<8x32xf32> to vector<8x32x1xf32>
    %38 = vector.broadcast %37 : vector<8x32x1xf32> to vector<8x32x16xf32>
    %39 = arith.subf %35, %38 : vector<8x32x16xf32>
    %40 = math.exp %39 : vector<8x32x16xf32>
    %cst_20 = arith.constant dense<0.000000e+00> : vector<8x32xf32>
    %41 = vector.multi_reduction <add>, %40, %cst_20 [2] : vector<8x32x16xf32> to vector<8x32xf32>
    %42 = vector.shape_cast %41 : vector<8x32xf32> to vector<8x32x1xf32>
    %43 = tpu.reciprocal %42 {approx = true} : vector<8x32x1xf32> -> vector<8x32x1xf32>
    %44 = vector.broadcast %43 : vector<8x32x1xf32> to vector<8x32x16xf32>
    %45 = arith.mulf %40, %44 : vector<8x32x16xf32>
    %46 = arith.truncf %45 : vector<8x32x16xf32> to vector<8x32x16xbf16>
    %cst_21 = arith.constant dense<0.000000e+00> : vector<8x32x4xf32>
    %47 = tpu.matmul %46, %34, %cst_21 {dimension_numbers = #tpu.dot_dimension_numbers<[2], [1], [1], [2], [0, 0, 0, 1, 1, 2], [0], [0]>} : vector<8x32x16xbf16>, vector<8x16x4xbf16>, vector<8x32x4xf32> -> vector<8x32x4xf32>
    %48 = vector.extract_strided_slice %47 {offsets = [0, 0, 0], sizes = [1, 32, 4], strides = [1, 1, 1]} : vector<8x32x4xf32> to vector<1x32x4xf32>
    %49 = vector.shape_cast %48 : vector<1x32x4xf32> to vector<32x4xf32>
    %50 = vector.extract_strided_slice %47 {offsets = [1, 0, 0], sizes = [1, 32, 4], strides = [1, 1, 1]} : vector<8x32x4xf32> to vector<1x32x4xf32>
    %51 = vector.shape_cast %50 : vector<1x32x4xf32> to vector<32x4xf32>
    %52 = vector.extract_strided_slice %47 {offsets = [2, 0, 0], sizes = [1, 32, 4], strides = [1, 1, 1]} : vector<8x32x4xf32> to vector<1x32x4xf32>
    %53 = vector.shape_cast %52 : vector<1x32x4xf32> to vector<32x4xf32>
    %54 = vector.extract_strided_slice %47 {offsets = [3, 0, 0], sizes = [1, 32, 4], strides = [1, 1, 1]} : vector<8x32x4xf32> to vector<1x32x4xf32>
    %55 = vector.shape_cast %54 : vector<1x32x4xf32> to vector<32x4xf32>
    %56 = vector.extract_strided_slice %47 {offsets = [4, 0, 0], sizes = [1, 32, 4], strides = [1, 1, 1]} : vector<8x32x4xf32> to vector<1x32x4xf32>
    %57 = vector.shape_cast %56 : vector<1x32x4xf32> to vector<32x4xf32>
    %58 = vector.extract_strided_slice %47 {offsets = [5, 0, 0], sizes = [1, 32, 4], strides = [1, 1, 1]} : vector<8x32x4xf32> to vector<1x32x4xf32>
    %59 = vector.shape_cast %58 : vector<1x32x4xf32> to vector<32x4xf32>
    %60 = vector.extract_strided_slice %47 {offsets = [6, 0, 0], sizes = [1, 32, 4], strides = [1, 1, 1]} : vector<8x32x4xf32> to vector<1x32x4xf32>
    %61 = vector.shape_cast %60 : vector<1x32x4xf32> to vector<32x4xf32>
    %62 = vector.extract_strided_slice %47 {offsets = [7, 0, 0], sizes = [1, 32, 4], strides = [1, 1, 1]} : vector<8x32x4xf32> to vector<1x32x4xf32>
    %63 = vector.shape_cast %62 : vector<1x32x4xf32> to vector<32x4xf32>
    %64 = tpu.concatenate %49, %51, %53, %55, %57, %59, %61, %63 in 1 : vector<32x4xf32>, vector<32x4xf32>, vector<32x4xf32>, vector<32x4xf32>, vector<32x4xf32>, vector<32x4xf32>, vector<32x4xf32>, vector<32x4xf32> -> vector<32x32xf32>
    %65 = arith.truncf %64 : vector<32x32xf32> to vector<32x32xbf16>
    %cst_22 = arith.constant dense<0.000000e+00> : vector<32x32xf32>
    %66 = tpu.matmul %65, %13, %cst_22 {dimension_numbers = #tpu.dot_dimension_numbers<[1], [0], [0], [1], [0, 0, 1, 1], [], []>} : vector<32x32xbf16>, vector<32x32xbf16>, vector<32x32xf32> -> vector<32x32xf32>
    %67 = vector.broadcast %14 : vector<1x32xf32> to vector<32x32xf32>
    %68 = arith.addf %66, %67 : vector<32x32xf32>
    %c0_23 = arith.constant 0 : index
    %c0_24 = arith.constant 0 : index
    %c0_25 = arith.constant 0 : index
    %69 = vector.load %arg14[%c0_23, %c0_24, %c0_25] : memref<1x32x32xf32, #tpu.memory_space<vmem>>, vector<1x32x32xf32>
    %70 = vector.shape_cast %69 : vector<1x32x32xf32> to vector<32x32xf32>
    %71 = vector.shape_cast %68 : vector<32x32xf32> to vector<1x32x32xf32>
    tpu.vector_store %arg14[%c0_23, %c0_24, %c0_25], %71 {strides = array<i32>} : memref<1x32x32xf32, #tpu.memory_space<vmem>>, vector<1x32x32xf32>,
    return
  }
  func.func @transform_0(%arg0: i32, %arg1: i32) -> (i32, i32, i32) {
    %c0_i32 = arith.constant 0 : i32
    %c0_i32_0 = arith.constant 0 : i32
    return %arg0, %arg1, %c0_i32 : i32, i32, i32
  }
  func.func @transform_1(%arg0: i32, %arg1: i32) -> (i32, i32, i32) {
    %c0_i32 = arith.constant 0 : i32
    %c0_i32_0 = arith.constant 0 : i32
    %c0_i32_1 = arith.constant 0 : i32
    return %arg0, %c0_i32, %c0_i32_0 : i32, i32, i32
  }
  func.func @transform_2(%arg0: i32, %arg1: i32) -> (i32, i32) {
    %c0_i32 = arith.constant 0 : i32
    %c0_i32_0 = arith.constant 0 : i32
    %c0_i32_1 = arith.constant 0 : i32
    return %c0_i32, %c0_i32_0 : i32, i32
  }
  func.func @transform_3(%arg0: i32, %arg1: i32) -> (i32, i32) {
    %c0_i32 = arith.constant 0 : i32
    %c0_i32_0 = arith.constant 0 : i32
    %c0_i32_1 = arith.constant 0 : i32
    return %c0_i32, %c0_i32_0 : i32, i32
  }
  func.func @transform_4(%arg0: i32, %arg1: i32) -> (i32, i32) {
    %c0_i32 = arith.constant 0 : i32
    %c0_i32_0 = arith.constant 0 : i32
    %c0_i32_1 = arith.constant 0 : i32
    return %c0_i32, %c0_i32_0 : i32, i32
  }
  func.func @transform_5(%arg0: i32, %arg1: i32) -> (i32, i32) {
    %c0_i32 = arith.constant 0 : i32
    %c0_i32_0 = arith.constant 0 : i32
    %c0_i32_1 = arith.constant 0 : i32
    return %c0_i32, %c0_i32_0 : i32, i32
  }
  func.func @transform_6(%arg0: i32, %arg1: i32) -> (i32, i32) {
    %c0_i32 = arith.constant 0 : i32
    %c0_i32_0 = arith.constant 0 : i32
    %c0_i32_1 = arith.constant 0 : i32
    return %c0_i32, %c0_i32_0 : i32, i32
  }
  func.func @transform_7(%arg0: i32, %arg1: i32) -> (i32, i32) {
    %c0_i32 = arith.constant 0 : i32
    %c0_i32_0 = arith.constant 0 : i32
    %c0_i32_1 = arith.constant 0 : i32
    return %c0_i32, %c0_i32_0 : i32, i32
  }
  func.func @transform_8(%arg0: i32, %arg1: i32) -> (i32, i32) {
    %c0_i32 = arith.constant 0 : i32
    %c0_i32_0 = arith.constant 0 : i32
    %c0_i32_1 = arith.constant 0 : i32
    return %c0_i32, %c0_i32_0 : i32, i32
  }
  func.func @transform_9(%arg0: i32, %arg1: i32) -> (i32, i32) {
    %c0_i32 = arith.constant 0 : i32
    %c0_i32_0 = arith.constant 0 : i32
    %c0_i32_1 = arith.constant 0 : i32
    return %c0_i32, %c0_i32_0 : i32, i32
  }
  func.func @transform_10(%arg0: i32, %arg1: i32) -> (i32, i32) {
    %c0_i32 = arith.constant 0 : i32
    %c0_i32_0 = arith.constant 0 : i32
    %c0_i32_1 = arith.constant 0 : i32
    return %c0_i32, %c0_i32_0 : i32, i32
  }
  func.func @transform_11(%arg0: i32, %arg1: i32) -> (i32, i32) {
    %c0_i32 = arith.constant 0 : i32
    %c0_i32_0 = arith.constant 0 : i32
    %c0_i32_1 = arith.constant 0 : i32
    return %c0_i32, %c0_i32_0 : i32, i32
  }
  func.func @transform_12(%arg0: i32, %arg1: i32) -> (i32, i32, i32) {
    %c0_i32 = arith.constant 0 : i32
    %c0_i32_0 = arith.constant 0 : i32
    return %arg0, %arg1, %c0_i32 : i32, i32, i32
  }
}

</mosaic_0001>

<llo_original>
// kernel: tpu_custom_call.1
$region0: #{tpu_custom_call.1}
  #allocation0 [shape = 'u32[]', space=smem, size = 0x4, offset = 0x4, fixed_abs, tag = 'smem constant byte address 0x4 - core index']
  #allocation1 [shape = 'u32[144,128]{1,0:T(1,128)}', space=vmem, size = 0x12000, scoped, tag = 'internal scratch']
  #allocation2 [shape = 'bf16[8,16,4]{2,1,0:T(8,128)(2,1)}', space=vmem, size = 0x8000, scoped, tag = 'scratch operand']
  #allocation3 [shape = 'bf16[8,16,4]{2,1,0:T(8,128)(2,1)}', space=vmem, size = 0x8000, scoped, tag = 'scratch operand']
  %s0 = inlined_call_operand.vmem [shape: f32[2,64,32], index: 0, kind: input, shape index: {}]
  %s1 = inlined_call_operand.vmem [shape: bf16[2,16,128], index: 1, kind: input, shape index: {}]
  %s2 = inlined_call_operand.vmem [shape: bf16[32,32], index: 2, kind: input, shape index: {}]
  %s3 = inlined_call_operand.vmem [shape: f32[1,32], index: 3, kind: input, shape index: {}]
  %s4 = inlined_call_operand.vmem [shape: bf16[32,64], index: 4, kind: input, shape index: {}]
  %s5 = inlined_call_operand.vmem [shape: f32[1,64], index: 5, kind: input, shape index: {}]
  %s6 = inlined_call_operand.vmem [shape: bf16[128,32], index: 6, kind: input, shape index: {}]
  %s7 = inlined_call_operand.vmem [shape: f32[1,32], index: 7, kind: input, shape index: {}]
  %s8 = inlined_call_operand.vmem [shape: f32[1,32], index: 8, kind: input, shape index: {}]
  %s9 = inlined_call_operand.vmem [shape: f32[1,32], index: 9, kind: input, shape index: {}]
  %s10 = inlined_call_operand.vmem [shape: bf16[32,32], index: 10, kind: input, shape index: {}]
  %s11 = inlined_call_operand.vmem [shape: f32[1,32], index: 11, kind: input, shape index: {}]
  %s12 = inlined_call_operand.vmem [shape: f32[2,64,32], index: 12, kind: output, shape index: {}]
  %s13 = sld [smem:[#allocation0]]
  $region85: #{tpu_custom_call.1} parent=0
    _
  %s15 = ssub.s32 1, %s13
  %s16 = scalar_select 0, %s15, %s13
  loop: start=0, step=1, limit=6
  $region2: #{tpu_custom_call.1} parent=0 // loop_pre_header
    _
  $region3: #{tpu_custom_call.1} parent=0 // loop_header
    %s18 = sphi 0, %s22
    %p19 = scmp.ge.s32.totalorder %s18, 6
    %s25 = sphi 0, %s37
    %s26 = sphi 0, %s33
    %s27 = sphi 0, %s25
    %s28 = sphi 0, %s26
    %s29 = sphi 0, %s27
    %s30 = sphi 0, %s28
    %s42 = sphi 0, %s44
    %s45 = sphi 0, %s42
    %s46 = sphi 0, %s45
    %s62 = sphi 0, %s46
    %s68 = sphi 0, %s70
    %s71 = sphi 0, %s68
    %s72 = sphi 0, %s71
    %s88 = sphi 0, %s72
    %s92 = sphi 0, %s92
    %s94 = sphi 0, %s92
    %s95 = sphi 0, %s94
    %s109 = sphi 0, %s95
    %s113 = sphi 0, %s113
    %s115 = sphi 0, %s113
    %s116 = sphi 0, %s115
    %s130 = sphi 0, %s116
    %s134 = sphi 0, %s134
    %s136 = sphi 0, %s134
    %s137 = sphi 0, %s136
    %s151 = sphi 0, %s137
    %s155 = sphi 0, %s155
    %s157 = sphi 0, %s155
    %s158 = sphi 0, %s157
    %s172 = sphi 0, %s158
    %s176 = sphi 0, %s176
    %s178 = sphi 0, %s176
    %s179 = sphi 0, %s178
    %s193 = sphi 0, %s179
    %s197 = sphi 0, %s197
    %s199 = sphi 0, %s197
    %s200 = sphi 0, %s199
    %s214 = sphi 0, %s200
    %s218 = sphi 0, %s218
    %s220 = sphi 0, %s218
    %s221 = sphi 0, %s220
    %s235 = sphi 0, %s221
    %s239 = sphi 0, %s239
    %s241 = sphi 0, %s239
    %s242 = sphi 0, %s241
    %s256 = sphi 0, %s242
    %s260 = sphi 0, %s260
    %s262 = sphi 0, %s260
    %s263 = sphi 0, %s262
    %s277 = sphi 0, %s263
    %s281 = sphi 0, %s281
    %s283 = sphi 0, %s281
    %s284 = sphi 0, %s283
    %s298 = sphi 0, %s284
    %s306 = sphi 0, %s308
    %s309 = sphi 0, %s306
    %s310 = sphi 0, %s309
    %s326 = sphi 0, %s310
  $region4: #{tpu_custom_call.1} parent=0 // loop_header_branch
    %21 = sbr.rel (%p19) target = $region8
  $region5: #{tpu_custom_call.1} parent=0 // loop_body
    %s23 = ssub.s32 %s18, 1
    %s24 = ssub.s32 %s18, 2
    %s31 = sadd.s32 1, %s26
    %p32 = scmp.ge.s32.totalorder %s31, 2
    %s33 = scalar_select %p32, 0, %s31
    %s34 = sadd.s32 1, %s25
    %s35 = scalar_select %p32, %s34, %s25
    %p36 = scmp.ge.s32.totalorder %s35, 2
    %s37 = scalar_select %p36, 0, %s35
    %s38 = ssub.s32 %s25, %s37
    %s39 = ssub.s32 %s26, %s33
    %s40 = sor.u32 %s38, %s39
    %p41 = scmp.eq.s32.totalorder %s40, 0
    %s43 = sadd.s32 %s42, 1
    %s44 = scalar_select %p41, %s42, %s43
    %p47 = pneg %p41
    %p48 = scmp.eq.s32.totalorder %s18, 3
    %p49 = por %p47, %p48
    %p50 = scmp.ne.s32.totalorder %s42, %s45
    %p51 = scmp.eq.s32.totalorder %s18, 0
    %p52 = por %p50, %p51
    %p53 = scmp.ne.s32.totalorder %s42, %s45
    %p54 = scmp.eq.s32.totalorder %s23, 3
    %p55 = por %p53, %p54
    %p56 = scmp.ne.s32.totalorder %s45, %s46
    %p57 = scmp.eq.s32.totalorder %s23, 0
    %p58 = por %p56, %p57
    %p59 = scmp.ne.s32.totalorder %s45, %s46
    %p60 = scmp.eq.s32.totalorder %s24, 3
    %p61 = por %p59, %p60
    %p63 = scmp.ne.s32.totalorder %s46, %s62
    %p64 = scmp.eq.s32.totalorder %s24, 0
    %p65 = por %p63, %p64
    %s66 = ssub.s32 %s25, %s37
    %p67 = scmp.eq.s32.totalorder %s66, 0
    %s69 = sadd.s32 %s68, 1
    %s70 = scalar_select %p67, %s68, %s69
    %p73 = pneg %p67
    %p74 = scmp.eq.s32.totalorder %s18, 3
    %p75 = por %p73, %p74
    %p76 = scmp.ne.s32.totalorder %s68, %s71
    %p77 = scmp.eq.s32.totalorder %s18, 0
    %p78 = por %p76, %p77
    %p79 = scmp.ne.s32.totalorder %s68, %s71
    %p80 = scmp.eq.s32.totalorder %s23, 3
    %p81 = por %p79, %p80
    %p82 = scmp.ne.s32.totalorder %s71, %s72
    %p83 = scmp.eq.s32.totalorder %s23, 0
    %p84 = por %p82, %p83
    %p85 = scmp.ne.s32.totalorder %s71, %s72
    %p86 = scmp.eq.s32.totalorder %s24, 3
    %p87 = por %p85, %p86
    %p89 = scmp.ne.s32.totalorder %s72, %s88
    %p90 = scmp.eq.s32.totalorder %s24, 0
    %p91 = por %p89, %p90
    %s93 = sadd.s32 %s92, 1
    %p96 = scmp.eq.s32.totalorder %s18, 3
    %p97 = scmp.ne.s32.totalorder %s92, %s94
    %p98 = scmp.eq.s32.totalorder %s18, 0
    %p99 = por %p97, %p98
    %p100 = scmp.ne.s32.totalorder %s92, %s94
    %p101 = scmp.eq.s32.totalorder %s23, 3
    %p102 = por %p100, %p101
    %p103 = scmp.ne.s32.totalorder %s94, %s95
    %p104 = scmp.eq.s32.totalorder %s23, 0
    %p105 = por %p103, %p104
    %p106 = scmp.ne.s32.totalorder %s94, %s95
    %p107 = scmp.eq.s32.totalorder %s24, 3
    %p108 = por %p106, %p107
    %p110 = scmp.ne.s32.totalorder %s95, %s109
    %p111 = scmp.eq.s32.totalorder %s24, 0
    %p112 = por %p110, %p111
    %s114 = sadd.s32 %s113, 1
    %p117 = scmp.eq.s32.totalorder %s18, 3
    %p118 = scmp.ne.s32.totalorder %s113, %s115
    %p119 = scmp.eq.s32.totalorder %s18, 0
    %p120 = por %p118, %p119
    %p121 = scmp.ne.s32.totalorder %s113, %s115
    %p122 = scmp.eq.s32.totalorder %s23, 3
    %p123 = por %p121, %p122
    %p124 = scmp.ne.s32.totalorder %s115, %s116
    %p125 = scmp.eq.s32.totalorder %s23, 0
    %p126 = por %p124, %p125
    %p127 = scmp.ne.s32.totalorder %s115, %s116
    %p128 = scmp.eq.s32.totalorder %s24, 3
    %p129 = por %p127, %p128
    %p131 = scmp.ne.s32.totalorder %s116, %s130
    %p132 = scmp.eq.s32.totalorder %s24, 0
    %p133 = por %p131, %p132
    %s135 = sadd.s32 %s134, 1
    %p138 = scmp.eq.s32.totalorder %s18, 3
    %p139 = scmp.ne.s32.totalorder %s134, %s136
    %p140 = scmp.eq.s32.totalorder %s18, 0
    %p141 = por %p139, %p140
    %p142 = scmp.ne.s32.totalorder %s134, %s136
    %p143 = scmp.eq.s32.totalorder %s23, 3
    %p144 = por %p142, %p143
    %p145 = scmp.ne.s32.totalorder %s136, %s137
    %p146 = scmp.eq.s32.totalorder %s23, 0
    %p147 = por %p145, %p146
    %p148 = scmp.ne.s32.totalorder %s136, %s137
    %p149 = scmp.eq.s32.totalorder %s24, 3
    %p150 = por %p148, %p149
    %p152 = scmp.ne.s32.totalorder %s137, %s151
    %p153 = scmp.eq.s32.totalorder %s24, 0
    %p154 = por %p152, %p153
    %s156 = sadd.s32 %s155, 1
    %p159 = scmp.eq.s32.totalorder %s18, 3
    %p160 = scmp.ne.s32.totalorder %s155, %s157
    %p161 = scmp.eq.s32.totalorder %s18, 0
    %p162 = por %p160, %p161
    %p163 = scmp.ne.s32.totalorder %s155, %s157
    %p164 = scmp.eq.s32.totalorder %s23, 3
    %p165 = por %p163, %p164
    %p166 = scmp.ne.s32.totalorder %s157, %s158
    %p167 = scmp.eq.s32.totalorder %s23, 0
    %p168 = por %p166, %p167
    %p169 = scmp.ne.s32.totalorder %s157, %s158
    %p170 = scmp.eq.s32.totalorder %s24, 3
    %p171 = por %p169, %p170
    %p173 = scmp.ne.s32.totalorder %s158, %s172
    %p174 = scmp.eq.s32.totalorder %s24, 0
    %p175 = por %p173, %p174
    %s177 = sadd.s32 %s176, 1
    %p180 = scmp.eq.s32.totalorder %s18, 3
    %p181 = scmp.ne.s32.totalorder %s176, %s178
    %p182 = scmp.eq.s32.totalorder %s18, 0
    %p183 = por %p181, %p182
    %p184 = scmp.ne.s32.totalorder %s176, %s178
    %p185 = scmp.eq.s32.totalorder %s23, 3
    %p186 = por %p184, %p185
    %p187 = scmp.ne.s32.totalorder %s178, %s179
    %p188 = scmp.eq.s32.totalorder %s23, 0
    %p189 = por %p187, %p188
    %p190 = scmp.ne.s32.totalorder %s178, %s179
    %p191 = scmp.eq.s32.totalorder %s24, 3
    %p192 = por %p190, %p191
    %p194 = scmp.ne.s32.totalorder %s179, %s193
    %p195 = scmp.eq.s32.totalorder %s24, 0
    %p196 = por %p194, %p195
    %s198 = sadd.s32 %s197, 1
    %p201 = scmp.eq.s32.totalorder %s18, 3
    %p202 = scmp.ne.s32.totalorder %s197, %s199
    %p203 = scmp.eq.s32.totalorder %s18, 0
    %p204 = por %p202, %p203
    %p205 = scmp.ne.s32.totalorder %s197, %s199
    %p206 = scmp.eq.s32.totalorder %s23, 3
    %p207 = por %p205, %p206
    %p208 = scmp.ne.s32.totalorder %s199, %s200
    %p209 = scmp.eq.s32.totalorder %s23, 0
    %p210 = por %p208, %p209
    %p211 = scmp.ne.s32.totalorder %s199, %s200
    %p212 = scmp.eq.s32.totalorder %s24, 3
    %p213 = por %p211, %p212
    %p215 = scmp.ne.s32.totalorder %s200, %s214
    %p216 = scmp.eq.s32.totalorder %s24, 0
    %p217 = por %p215, %p216
    %s219 = sadd.s32 %s218, 1
    %p222 = scmp.eq.s32.totalorder %s18, 3
    %p223 = scmp.ne.s32.totalorder %s218, %s220
    %p224 = scmp.eq.s32.totalorder %s18, 0
    %p225 = por %p223, %p224
    %p226 = scmp.ne.s32.totalorder %s218, %s220
    %p227 = scmp.eq.s32.totalorder %s23, 3
    %p228 = por %p226, %p227
    %p229 = scmp.ne.s32.totalorder %s220, %s221
    %p230 = scmp.eq.s32.totalorder %s23, 0
    %p231 = por %p229, %p230
    %p232 = scmp.ne.s32.totalorder %s220, %s221
    %p233 = scmp.eq.s32.totalorder %s24, 3
    %p234 = por %p232, %p233
    %p236 = scmp.ne.s32.totalorder %s221, %s235
    %p237 = scmp.eq.s32.totalorder %s24, 0
    %p238 = por %p236, %p237
    %s240 = sadd.s32 %s239, 1
    %p243 = scmp.eq.s32.totalorder %s18, 3
    %p244 = scmp.ne.s32.totalorder %s239, %s241
    %p245 = scmp.eq.s32.totalorder %s18, 0
    %p246 = por %p244, %p245
    %p247 = scmp.ne.s32.totalorder %s239, %s241
    %p248 = scmp.eq.s32.totalorder %s23, 3
    %p249 = por %p247, %p248
    %p250 = scmp.ne.s32.totalorder %s241, %s242
    %p251 = scmp.eq.s32.totalorder %s23, 0
    %p252 = por %p250, %p251
    %p253 = scmp.ne.s32.totalorder %s241, %s242
    %p254 = scmp.eq.s32.totalorder %s24, 3
    %p255 = por %p253, %p254
    %p257 = scmp.ne.s32.totalorder %s242, %s256
    %p258 = scmp.eq.s32.totalorder %s24, 0
    %p259 = por %p257, %p258
    %s261 = sadd.s32 %s260, 1
    %p264 = scmp.eq.s32.totalorder %s18, 3
    %p265 = scmp.ne.s32.totalorder %s260, %s262
    %p266 = scmp.eq.s32.totalorder %s18, 0
    %p267 = por %p265, %p266
    %p268 = scmp.ne.s32.totalorder %s260, %s262
    %p269 = scmp.eq.s32.totalorder %s23, 3
    %p270 = por %p268, %p269
    %p271 = scmp.ne.s32.totalorder %s262, %s263
    %p272 = scmp.eq.s32.totalorder %s23, 0
    %p273 = por %p271, %p272
    %p274 = scmp.ne.s32.totalorder %s262, %s263
    %p275 = scmp.eq.s32.totalorder %s24, 3
    %p276 = por %p274, %p275
    %p278 = scmp.ne.s32.totalorder %s263, %s277
    %p279 = scmp.eq.s32.totalorder %s24, 0
    %p280 = por %p278, %p279
    %s282 = sadd.s32 %s281, 1
    %p285 = scmp.eq.s32.totalorder %s18, 3
    %p286 = scmp.ne.s32.totalorder %s281, %s283
    %p287 = scmp.eq.s32.totalorder %s18, 0
    %p288 = por %p286, %p287
    %p289 = scmp.ne.s32.totalorder %s281, %s283
    %p290 = scmp.eq.s32.totalorder %s23, 3
    %p291 = por %p289, %p290
    %p292 = scmp.ne.s32.totalorder %s283, %s284
    %p293 = scmp.eq.s32.totalorder %s23, 0
    %p294 = por %p292, %p293
    %p295 = scmp.ne.s32.totalorder %s283, %s284
    %p296 = scmp.eq.s32.totalorder %s24, 3
    %p297 = por %p295, %p296
    %p299 = scmp.ne.s32.totalorder %s284, %s298
    %p300 = scmp.eq.s32.totalorder %s24, 0
    %p301 = por %p299, %p300
    %s302 = ssub.s32 %s25, %s37
    %s303 = ssub.s32 %s26, %s33
    %s304 = sor.u32 %s302, %s303
    %p305 = scmp.eq.s32.totalorder %s304, 0
    %s307 = sadd.s32 %s306, 1
    %s308 = scalar_select %p305, %s306, %s307
    %p311 = pneg %p305
    %p312 = scmp.eq.s32.totalorder %s18, 3
    %p313 = por %p311, %p312
    %p314 = scmp.ne.s32.totalorder %s306, %s309
    %p315 = scmp.eq.s32.totalorder %s18, 0
    %p316 = por %p314, %p315
    %p317 = scmp.ne.s32.totalorder %s306, %s309
    %p318 = scmp.eq.s32.totalorder %s23, 3
    %p319 = por %p317, %p318
    %p320 = scmp.ne.s32.totalorder %s309, %s310
    %p321 = scmp.eq.s32.totalorder %s23, 0
    %p322 = por %p320, %p321
    %p323 = scmp.ne.s32.totalorder %s309, %s310
    %p324 = scmp.eq.s32.totalorder %s24, 3
    %p325 = por %p323, %p324
    %p327 = scmp.ne.s32.totalorder %s310, %s326
    %p328 = scmp.eq.s32.totalorder %s24, 0
    %p329 = por %p327, %p328
    %p330 = scmp.le.s32.totalorder 1, %s18
    %p331 = scmp.lt.s32.totalorder %s18, 5
    %p332 = pnand %p330, %p331
    %p333 = pneg %p332
    // Predicated region
    $region9: #{tpu_custom_call.1} parent=5 // pred_check
      _
    $region10: #{tpu_custom_call.1} parent=5 // pred_check_branch
      %335 = sbr.rel (%p332) target = $region12
    $region11: #{tpu_custom_call.1} parent=5 // pred_region
      %s336 = ssub.s32 %s18, 1
      // Predicated region
      $region13: #{tpu_custom_call.1} parent=11 // pred_check
        %p337 = pneg %p105
      $region14: #{tpu_custom_call.1} parent=11 // pred_check_branch
        %339 = sbr.rel (%p337) target = $region16
      $region15: #{tpu_custom_call.1} parent=11 // pred_region
        _
      $region16: #{tpu_custom_call.1} parent=11 // pred_fallthru
        _
      // Predicated region
      $region17: #{tpu_custom_call.1} parent=11 // pred_check
        %p340 = pneg %p126
      $region18: #{tpu_custom_call.1} parent=11 // pred_check_branch
        %342 = sbr.rel (%p340) target = $region20
      $region19: #{tpu_custom_call.1} parent=11 // pred_region
        _
      $region20: #{tpu_custom_call.1} parent=11 // pred_fallthru
        _
      // Predicated region
      $region21: #{tpu_custom_call.1} parent=11 // pred_check
        %p343 = pneg %p147
      $region22: #{tpu_custom_call.1} parent=11 // pred_check_branch
        %345 = sbr.rel (%p343) target = $region24
      $region23: #{tpu_custom_call.1} parent=11 // pred_region
        _
      $region24: #{tpu_custom_call.1} parent=11 // pred_fallthru
        _
      // Predicated region
      $region25: #{tpu_custom_call.1} parent=11 // pred_check
        %p346 = pneg %p168
      $region26: #{tpu_custom_call.1} parent=11 // pred_check_branch
        %348 = sbr.rel (%p346) target = $region28
      $region27: #{tpu_custom_call.1} parent=11 // pred_region
        _
      $region28: #{tpu_custom_call.1} parent=11 // pred_fallthru
        _
      // Predicated region
      $region29: #{tpu_custom_call.1} parent=11 // pred_check
        %p349 = pneg %p189
      $region30: #{tpu_custom_call.1} parent=11 // pred_check_branch
        %351 = sbr.rel (%p349) target = $region32
      $region31: #{tpu_custom_call.1} parent=11 // pred_region
        _
      $region32: #{tpu_custom_call.1} parent=11 // pred_fallthru
        _
      // Predicated region
      $region33: #{tpu_custom_call.1} parent=11 // pred_check
        %p352 = pneg %p210
      $region34: #{tpu_custom_call.1} parent=11 // pred_check_branch
        %354 = sbr.rel (%p352) target = $region36
      $region35: #{tpu_custom_call.1} parent=11 // pred_region
        _
      $region36: #{tpu_custom_call.1} parent=11 // pred_fallthru
        _
      // Predicated region
      $region37: #{tpu_custom_call.1} parent=11 // pred_check
        %p355 = pneg %p231
      $region38: #{tpu_custom_call.1} parent=11 // pred_check_branch
        %357 = sbr.rel (%p355) target = $region40
      $region39: #{tpu_custom_call.1} parent=11 // pred_region
        _
      $region40: #{tpu_custom_call.1} parent=11 // pred_fallthru
        _
      // Predicated region
      $region41: #{tpu_custom_call.1} parent=11 // pred_check
        %p358 = pneg %p252
      $region42: #{tpu_custom_call.1} parent=11 // pred_check_branch
        %360 = sbr.rel (%p358) target = $region44
      $region43: #{tpu_custom_call.1} parent=11 // pred_region
        _
      $region44: #{tpu_custom_call.1} parent=11 // pred_fallthru
        _
      // Predicated region
      $region45: #{tpu_custom_call.1} parent=11 // pred_check
        %p361 = pneg %p273
      $region46: #{tpu_custom_call.1} parent=11 // pred_check_branch
        %363 = sbr.rel (%p361) target = $region48
      $region47: #{tpu_custom_call.1} parent=11 // pred_region
        _
      $region48: #{tpu_custom_call.1} parent=11 // pred_fallthru
        _
      // Predicated region
      $region49: #{tpu_custom_call.1} parent=11 // pred_check
        %p364 = pneg %p294
      $region50: #{tpu_custom_call.1} parent=11 // pred_check_branch
        %366 = sbr.rel (%p364) target = $region52
      $region51: #{tpu_custom_call.1} parent=11 // pred_region
        _
      $region52: #{tpu_custom_call.1} parent=11 // pred_fallthru
        _
    $region12: #{tpu_custom_call.1} parent=5 // pred_fallthru
      _
    %p367 = scmp.lt.s32.totalorder %s18, 4
    // Predicated region
    $region53: #{tpu_custom_call.1} parent=5 // pred_check
      %p368 = pneg %p367
    $region54: #{tpu_custom_call.1} parent=5 // pred_check_branch
      %370 = sbr.rel (%p368) target = $region56
    $region55: #{tpu_custom_call.1} parent=5 // pred_region
      // Predicated region
      $region57: #{tpu_custom_call.1} parent=55 // pred_check
        %p371 = pneg %p52
      $region58: #{tpu_custom_call.1} parent=55 // pred_check_branch
        %373 = sbr.rel (%p371) target = $region60
      $region59: #{tpu_custom_call.1} parent=55 // pred_region
        %s374 = smul.u32 4, %s26
        %p375 = scmp.lt.s32.totalorder %s25, 1
        %s376 = scalar_select %p375, %s25, 1
        %p377 = scmp.lt.s32.totalorder %s374, 7
        %s378 = scalar_select %p377, %s374, 7
        %s379 = smul.addr %s376, 8
        %s380 = sadd.s32 %s378, %s379
        %s381 = smul.addr %s380, 8
        %s382 = scalar_lea.vmem %s0, %s381
        %s383 = smul.u32 4, %s26
      $region60: #{tpu_custom_call.1} parent=55 // pred_fallthru
        _
      // Predicated region
      $region61: #{tpu_custom_call.1} parent=55 // pred_check
        %p384 = pneg %p78
      $region62: #{tpu_custom_call.1} parent=55 // pred_check_branch
        %386 = sbr.rel (%p384) target = $region64
      $region63: #{tpu_custom_call.1} parent=55 // pred_region
        %p387 = scmp.lt.s32.totalorder %s25, 1
        %s388 = scalar_select %p387, %s25, 1
        %s389 = smul.addr %s388, 2
        %s390 = smul.addr %s389, 4
        %s391 = scalar_lea.vmem %s1, %s390
      $region64: #{tpu_custom_call.1} parent=55 // pred_fallthru
        _
    $region56: #{tpu_custom_call.1} parent=5 // pred_fallthru
      _
    %p392 = scmp.le.s32.totalorder 1, %s18
    %p393 = scmp.lt.s32.totalorder %s18, 5
    %p394 = pnand %p392, %p393
    %p395 = pneg %p394
    // Predicated region
    $region65: #{tpu_custom_call.1} parent=5 // pred_check
      _
    $region66: #{tpu_custom_call.1} parent=5 // pred_check_branch
      %397 = sbr.rel (%p394) target = $region68
    $region67: #{tpu_custom_call.1} parent=5 // pred_region
      %s398 = ssub.s32 %s18, 1
      %s399 = smul.u32 4, %s28
      %p400 = scmp.lt.s32.totalorder %s27, 1
      %s401 = scalar_select %p400, %s27, 1
      %p402 = scmp.lt.s32.totalorder %s399, 7
      %s403 = scalar_select %p402, %s399, 7
      %s404 = smul.addr %s401, 8
      %s405 = sadd.s32 %s403, %s404
      %s406 = smul.addr %s405, 8
      %s407 = scalar_lea.vmem %s0, %s406
      %p408 = pneg %p58
      %p409 = pneg %p55
      %p410 = scmp.lt.s32.totalorder %s27, 1
      %s411 = scalar_select %p410, %s27, 1
      %s412 = smul.addr %s411, 2
      %s413 = smul.addr %s412, 4
      %s414 = scalar_lea.vmem %s1, %s413
      %p415 = pneg %p84
      %p416 = pneg %p81
      %p417 = pneg %p105
      %p418 = pneg %p102
      %p419 = pneg %p126
      %p420 = pneg %p123
      %p421 = pneg %p147
      %p422 = pneg %p144
      %p423 = pneg %p168
      %p424 = pneg %p165
      %p425 = pneg %p189
      %p426 = pneg %p186
      %p427 = pneg %p210
      %p428 = pneg %p207
      %p429 = pneg %p231
      %p430 = pneg %p228
      %p431 = pneg %p252
      %p432 = pneg %p249
      %p433 = pneg %p273
      %p434 = pneg %p270
      %p435 = pneg %p294
      %p436 = pneg %p291
      %p437 = pneg %p322
      %p438 = pneg %p319
      %s439 = smul.u32 4, %s28
      %p440 = scmp.lt.s32.totalorder %s27, 1
      %s441 = scalar_select %p440, %s27, 1
      %p442 = scmp.lt.s32.totalorder %s439, 7
      %s443 = scalar_select %p442, %s439, 7
      %s444 = smul.addr %s441, 8
      %s445 = sadd.s32 %s443, %s444
      %s446 = smul.addr %s445, 8
      %s447 = scalar_lea.vmem %s12, %s446
      %s448 = smul.u32 4, %s28
      %p449 = scmp.lt.s32.totalorder %s27, 1
      %s450 = scalar_select %p449, %s27, 1
      %p451 = scmp.lt.s32.totalorder %s448, 7
      %s452 = scalar_select %p451, %s448, 7
      %s453 = smul.addr %s450, 8
      %s454 = sadd.s32 %s452, %s453
      %s455 = smul.addr %s454, 8
      %s456 = scalar_lea.vmem %s0, %s455
      %s457 = smul.u32 4, %s28
      %p458 = scmp.lt.s32.totalorder %s27, 1
      %s459 = scalar_select %p458, %s27, 1
      %s460 = smul.addr %s459, 2
      %s461 = smul.addr %s460, 4
      %s462 = scalar_lea.vmem %s1, %s461
      %s463 = smul.u32 4, %s28
      %p464 = scmp.lt.s32.totalorder %s27, 1
      %s465 = scalar_select %p464, %s27, 1
      %p466 = scmp.lt.s32.totalorder %s463, 7
      %s467 = scalar_select %p466, %s463, 7
      %s468 = smul.addr %s465, 8
      %s469 = sadd.s32 %s467, %s468
      %s470 = smul.addr %s469, 8
      %s471 = scalar_lea.vmem %s12, %s470
      %s472 = smul.u32 4, %s28
      %p474 = scmp.eq.s32.totalorder %s28, 0
      // Predicated region
      $region69: #{tpu_custom_call.1} parent=67 // pred_check
        %p475 = pneg %p474
      $region70: #{tpu_custom_call.1} parent=67 // pred_check_branch
        %477 = sbr.rel (%p475) target = $region72
      $region71: #{tpu_custom_call.1} parent=67 // pred_region
        %v478 = vld [vmem:[%s462] sm:$0xf]
        %v479 = vld [vmem:[%s462 + $0x4] sm:$0xf]
        %v480 = vld [vmem:[%s6] sm:$0xf]
        %v481 = vld [vmem:[%s6 + $0x4] sm:$0xf]
        %v482 = vld [vmem:[%s6 + $0x8] sm:$0xf]
        %v483 = vld [vmem:[%s6 + $0xc] sm:$0xf]
        %v484 = vld [vmem:[%s6 + $0x10] sm:$0xf]
        %v485 = vld [vmem:[%s6 + $0x14] sm:$0xf]
        %v486 = vld [vmem:[%s6 + $0x18] sm:$0xf]
        %v487 = vld [vmem:[%s6 + $0x1c] sm:$0xf]
        %v488 = vld [vmem:[%s6 + $0x20] sm:$0xf]
        %v489 = vld [vmem:[%s6 + $0x24] sm:$0xf]
        %v490 = vld [vmem:[%s6 + $0x28] sm:$0xf]
        %v491 = vld [vmem:[%s6 + $0x2c] sm:$0xf]
        %v492 = vld [vmem:[%s6 + $0x30] sm:$0xf]
        %v493 = vld [vmem:[%s6 + $0x34] sm:$0xf]
        %v494 = vld [vmem:[%s6 + $0x38] sm:$0xf]
        %v495 = vld [vmem:[%s6 + $0x3c] sm:$0xf]
        %v496 = vld [vmem:[%s7] sm:$0x1]
        %v498 = vlaneseq
        %v499 = vshrl.u32 %v498, 7
        %v500 = vsub.s32 0, %v499
        %v501 = vrot.slane %v496, %v500
        %v505 = vunpack.c.l.b16 %v478
        %v506 = vunpack.c.l.b16 %v479
        %v507 = vpack.c.b16 %v506, %v505
        %v525 = vunpack.c.l.b16 %v480
        %v526 = vunpack.c.l.b16 %v481
        %v527 = vunpack.c.l.b16 %v482
        %v528 = vunpack.c.l.b16 %v483
        %v529 = vunpack.c.l.b16 %v484
        %v530 = vunpack.c.l.b16 %v485
        %v531 = vunpack.c.l.b16 %v486
        %v532 = vunpack.c.l.b16 %v487
        %v533 = vunpack.c.l.b16 %v488
        %v534 = vunpack.c.l.b16 %v489
        %v535 = vunpack.c.l.b16 %v490
        %v536 = vunpack.c.l.b16 %v491
        %v537 = vunpack.c.l.b16 %v492
        %v538 = vunpack.c.l.b16 %v493
        %v539 = vunpack.c.l.b16 %v494
        %v540 = vunpack.c.l.b16 %v495
        %v541 = vpack.c.b16 %v526, %v525
        %v542 = vpack.c.b16 %v528, %v527
        %v543 = vpack.c.b16 %v530, %v529
        %v544 = vpack.c.b16 %v532, %v531
        %v545 = vpack.c.b16 %v534, %v533
        %v546 = vpack.c.b16 %v536, %v535
        %v547 = vpack.c.b16 %v538, %v537
        %v548 = vpack.c.b16 %v540, %v539
        %557 = vmatprep.subr.bf16.mxu0 0
        %558 = vmatpush1.bf16.msra.mxu0 %v548
        %559 = vmatprep.subr.bf16.mxu0 0
        %560 = vmatpush1.bf16.msra.mxu0 %v547
        %561 = vmatprep.subr.bf16.mxu0 0
        %562 = vmatpush1.bf16.msra.mxu0 %v546
        %563 = vmatprep.subr.bf16.mxu0 0
        %564 = vmatpush1.bf16.msra.mxu0 %v545
        %565 = vmatprep.subr.bf16.mxu0 0
        %566 = vmatpush1.bf16.msra.mxu0 %v544
        %567 = vmatprep.subr.bf16.mxu0 0
        %568 = vmatpush1.bf16.msra.mxu0 %v543
        %569 = vmatprep.subr.bf16.mxu0 0
        %570 = vmatpush1.bf16.msra.mxu0 %v542
        %571 = vmatprep.subr.bf16.mxu0 0
        %572 = vmatpush1.bf16.msra.mxu0 %v541
        %573 = vmatprep.subr.bf16.mxu0 0
        %574 = vmatpush2.bf16.msra.mxu0 0
        %575 = vmatprep.subr.bf16.mxu0 0
        %576 = vmatpush2.bf16.msra.mxu0 0
        %577 = vmatprep.subr.bf16.mxu0 0
        %578 = vmatpush2.bf16.msra.mxu0 0
        %579 = vmatprep.subr.bf16.mxu0 0
        %580 = vmatpush2.bf16.msra.mxu0 0
        %581 = vmatprep.subr.bf16.mxu0 0
        %582 = vmatpush2.bf16.msra.mxu0 0
        %583 = vmatprep.subr.bf16.mxu0 0
        %584 = vmatpush2.bf16.msra.mxu0 0
        %585 = vmatprep.subr.bf16.mxu0 0
        %586 = vmatpush2.bf16.msra.mxu0 0
        %587 = vmatprep.subr.bf16.mxu0 0
        %588 = vmatpush2.bf16.msra.mxu0 0
        %589 = vmatprep.mubr.bf16.mxu0 0
        %590 = vmatmul.mubr.bf16.gmra.mxu0 %v507
        %v591 = vpop.f32.mrf.mxu0
        %v592 = vadd.f32 %v501, %v591
        %v593 = vpop.f32.mrf.mxu0
        %v594 = vpop.f32.mrf.mxu0
        %v595 = vadd.f32 %v501, %v594
        %v596 = vpop.f32.mrf.mxu0
        %597 = vdwg.mxu0
        %vm598 = vcmask 261120
        %v599 = vsel %vm598, %v592, 0.0
        %600 = vadd.xlane.f32.xlu0 %v599
        %v601 = vpop.xlane.xlu0 %600
        %v602 = vsel %vm598, %v595, 0.0
        %603 = vadd.xlane.f32.xlu0 %v602
        %v604 = vpop.xlane.xlu0 %603
        %v605 = vrcp.pop 32.0
        %v606 = vmul.f32 %v601, %v605
        %v607 = vmul.f32 %v604, %v605
        %v608 = vsub.f32 %v592, %v606
        %v609 = vsub.f32 %v595, %v607
        %v610 = vmul.f32 %v608, %v608
        %v611 = vmul.f32 %v609, %v609
        %v612 = vsel %vm598, %v610, 0.0
        %613 = vadd.xlane.f32.xlu0 %v612
        %v614 = vpop.xlane.xlu0 %613
        %v615 = vsel %vm598, %v611, 0.0
        %616 = vadd.xlane.f32.xlu0 %v615
        %v617 = vpop.xlane.xlu0 %616
        %v618 = vmul.f32 %v614, %v605
        %v619 = vmul.f32 %v617, %v605
        %v620 = vadd.f32 %v618, 1e-05
        %v621 = vadd.f32 %v619, 1e-05
        %v622 = vrsqrt.pop %v620
        %v623 = vrsqrt.pop %v621
        %v624 = vmul.f32 %v608, %v622
        %v625 = vmul.f32 %v609, %v623
        %v626 = vld [vmem:[%s8] sm:$0x1]
        %v628 = vlaneseq
        %v629 = vshrl.u32 %v628, 7
        %v630 = vsub.s32 0, %v629
        %v631 = vrot.slane %v626, %v630
        %v633 = vmul.f32 %v624, %v631
        %v634 = vmul.f32 %v625, %v631
        %v635 = vld [vmem:[%s9] sm:$0x1]
        %v637 = vlaneseq
        %v638 = vshrl.u32 %v637, 7
        %v639 = vsub.s32 0, %v638
        %v640 = vrot.slane %v635, %v639
        %v642 = vadd.f32 %v633, %v640
        %v643 = vadd.f32 %v634, %v640
        %v644 = vpack.c.bf16 %v643, %v642
        %v645 = vld [vmem:[%s4] sm:$0xf]
        %v646 = vld [vmem:[%s4 + $0x4] sm:$0xf]
        %v647 = vld [vmem:[%s4 + $0x8] sm:$0xf]
        %v648 = vld [vmem:[%s4 + $0xc] sm:$0xf]
        %v649 = vld [vmem:[%s5] sm:$0x1]
        %v651 = vlaneseq
        %v652 = vshrl.u32 %v651, 7
        %v653 = vsub.s32 0, %v652
        %v654 = vrot.slane %v649, %v653
        %v660 = vunpack.c.l.b16 %v645
        %v661 = vunpack.c.l.b16 %v646
        %v662 = vunpack.c.l.b16 %v647
        %v663 = vunpack.c.l.b16 %v648
        %v664 = vpack.c.b16 %v661, %v660
        %v665 = vpack.c.b16 %v663, %v662
        %v669 = vsel %vm598, %v644, 0
        %671 = vmatprep.subr.bf16.mxu0 0
        %672 = vmatpush1.bf16.msra.mxu0 0
        %673 = vmatprep.subr.bf16.mxu0 0
        %674 = vmatpush1.bf16.msra.mxu0 0
        %675 = vmatprep.subr.bf16.mxu0 0
        %676 = vmatpush1.bf16.msra.mxu0 0
        %677 = vmatprep.subr.bf16.mxu0 0
        %678 = vmatpush1.bf16.msra.mxu0 0
        %679 = vmatprep.subr.bf16.mxu0 0
        %680 = vmatpush1.bf16.msra.mxu0 0
        %681 = vmatprep.subr.bf16.mxu0 0
        %682 = vmatpush1.bf16.msra.mxu0 0
        %683 = vmatprep.subr.bf16.mxu0 0
        %684 = vmatpush1.bf16.msra.mxu0 %v665
        %685 = vmatprep.subr.bf16.mxu0 0
        %686 = vmatpush1.bf16.msra.mxu0 %v664
        %687 = vmatprep.subr.bf16.mxu0 0
        %688 = vmatpush2.bf16.msra.mxu0 0
        %689 = vmatprep.subr.bf16.mxu0 0
        %690 = vmatpush2.bf16.msra.mxu0 0
        %691 = vmatprep.subr.bf16.mxu0 0
        %692 = vmatpush2.bf16.msra.mxu0 0
        %693 = vmatprep.subr.bf16.mxu0 0
        %694 = vmatpush2.bf16.msra.mxu0 0
        %695 = vmatprep.subr.bf16.mxu0 0
        %696 = vmatpush2.bf16.msra.mxu0 0
        %697 = vmatprep.subr.bf16.mxu0 0
        %698 = vmatpush2.bf16.msra.mxu0 0
        %699 = vmatprep.subr.bf16.mxu0 0
        %700 = vmatpush2.bf16.msra.mxu0 0
        %701 = vmatprep.subr.bf16.mxu0 0
        %702 = vmatpush2.bf16.msra.mxu0 0
        %703 = vmatprep.mubr.bf16.mxu0 0
        %704 = vmatmul.mubr.bf16.gmra.mxu0 %v669
        %v705 = vpop.f32.mrf.mxu0
        %v706 = vadd.f32 %v654, %v705
        %v707 = vpop.f32.mrf.mxu0
        %v708 = vpop.f32.mrf.mxu0
        %v709 = vadd.f32 %v654, %v708
        %v710 = vpop.f32.mrf.mxu0
        %711 = vdwg.mxu0
        %v712 = vpack.c.bf16 %v709, %v706
        %714 = vrot.lane.b32.xlu0 %v712, 124
        %v715 = vpop.permute.xlu0 %714
        %716 = vrot.lane.b32.xlu0 %v712, 120
        %v717 = vpop.permute.xlu0 %716
        %718 = vrot.lane.b32.xlu0 %v712, 116
        %v719 = vpop.permute.xlu0 %718
        %720 = vrot.lane.b32.xlu0 %v712, 112
        %v721 = vpop.permute.xlu0 %720
        %722 = vrot.lane.b32.xlu0 %v712, 108
        %v723 = vpop.permute.xlu0 %722
        %724 = vrot.lane.b32.xlu0 %v712, 104
        %v725 = vpop.permute.xlu0 %724
        %726 = vrot.lane.b32.xlu0 %v712, 100
        %v727 = vpop.permute.xlu0 %726
        %v728 = vunpack.c.l.b16 %v712
        %v729 = vunpack.c.h.b16 %v712
        %v730 = vunpack.c.l.b16 %v715
        %v731 = vunpack.c.h.b16 %v715
        %v732 = vunpack.c.l.b16 %v717
        %v733 = vunpack.c.h.b16 %v717
        %v734 = vunpack.c.l.b16 %v719
        %v735 = vunpack.c.h.b16 %v719
        %v736 = vunpack.c.l.b16 %v721
        %v737 = vunpack.c.h.b16 %v721
        %v738 = vunpack.c.l.b16 %v723
        %v739 = vunpack.c.h.b16 %v723
        %v740 = vunpack.c.l.b16 %v725
        %v741 = vunpack.c.h.b16 %v725
        %v742 = vunpack.c.l.b16 %v727
        %v743 = vunpack.c.h.b16 %v727
        %v744 = vpack.c.b16 %v728, %v728
        %v745 = vpack.c.b16 %v729, %v729
        %v746 = vpack.c.b16 %v730, %v730
        %v747 = vpack.c.b16 %v731, %v731
        %v748 = vpack.c.b16 %v732, %v732
        %v749 = vpack.c.b16 %v733, %v733
        %v750 = vpack.c.b16 %v734, %v734
        %v751 = vpack.c.b16 %v735, %v735
        %v752 = vpack.c.b16 %v736, %v736
        %v753 = vpack.c.b16 %v737, %v737
        %v754 = vpack.c.b16 %v738, %v738
        %v755 = vpack.c.b16 %v739, %v739
        %v756 = vpack.c.b16 %v740, %v740
        %v757 = vpack.c.b16 %v741, %v741
        %v758 = vpack.c.b16 %v742, %v742
        %v759 = vpack.c.b16 %v743, %v743
        %vm776 = vcmask 27648
        %777 = vst.msk [vmem:[#allocation2] sm:$0xf] %vm776, %v744
        %778 = vst.msk [vmem:[#allocation2 + $0x4] sm:$0xf] %vm776, %v745
        %779 = vst.msk [vmem:[#allocation2 + $0x8] sm:$0xf] %vm776, %v746
        %780 = vst.msk [vmem:[#allocation2 + $0xc] sm:$0xf] %vm776, %v747
        %781 = vst.msk [vmem:[#allocation2 + $0x10] sm:$0xf] %vm776, %v748
        %782 = vst.msk [vmem:[#allocation2 + $0x14] sm:$0xf] %vm776, %v749
        %783 = vst.msk [vmem:[#allocation2 + $0x18] sm:$0xf] %vm776, %v750
        %784 = vst.msk [vmem:[#allocation2 + $0x1c] sm:$0xf] %vm776, %v751
        %785 = vst.msk [vmem:[#allocation2 + $0x20] sm:$0xf] %vm776, %v752
        %786 = vst.msk [vmem:[#allocation2 + $0x24] sm:$0xf] %vm776, %v753
        %787 = vst.msk [vmem:[#allocation2 + $0x28] sm:$0xf] %vm776, %v754
        %788 = vst.msk [vmem:[#allocation2 + $0x2c] sm:$0xf] %vm776, %v755
        %789 = vst.msk [vmem:[#allocation2 + $0x30] sm:$0xf] %vm776, %v756
        %790 = vst.msk [vmem:[#allocation2 + $0x34] sm:$0xf] %vm776, %v757
        %791 = vst.msk [vmem:[#allocation2 + $0x38] sm:$0xf] %vm776, %v758
        %792 = vst.msk [vmem:[#allocation2 + $0x3c] sm:$0xf] %vm776, %v759
        %793 = vrot.lane.b32.xlu0 %v744, 96
        %v794 = vpop.permute.xlu0 %793
        %795 = vrot.lane.b32.xlu0 %v745, 96
        %v796 = vpop.permute.xlu0 %795
        %797 = vrot.lane.b32.xlu0 %v746, 96
        %v798 = vpop.permute.xlu0 %797
        %799 = vrot.lane.b32.xlu0 %v747, 96
        %v800 = vpop.permute.xlu0 %799
        %801 = vrot.lane.b32.xlu0 %v748, 96
        %v802 = vpop.permute.xlu0 %801
        %803 = vrot.lane.b32.xlu0 %v749, 96
        %v804 = vpop.permute.xlu0 %803
        %805 = vrot.lane.b32.xlu0 %v750, 96
        %v806 = vpop.permute.xlu0 %805
        %807 = vrot.lane.b32.xlu0 %v751, 96
        %v808 = vpop.permute.xlu0 %807
        %809 = vrot.lane.b32.xlu0 %v752, 96
        %v810 = vpop.permute.xlu0 %809
        %811 = vrot.lane.b32.xlu0 %v753, 96
        %v812 = vpop.permute.xlu0 %811
        %813 = vrot.lane.b32.xlu0 %v754, 96
        %v814 = vpop.permute.xlu0 %813
        %815 = vrot.lane.b32.xlu0 %v755, 96
        %v816 = vpop.permute.xlu0 %815
        %817 = vrot.lane.b32.xlu0 %v756, 96
        %v818 = vpop.permute.xlu0 %817
        %819 = vrot.lane.b32.xlu0 %v757, 96
        %v820 = vpop.permute.xlu0 %819
        %821 = vrot.lane.b32.xlu0 %v758, 96
        %v822 = vpop.permute.xlu0 %821
        %823 = vrot.lane.b32.xlu0 %v759, 96
        %v824 = vpop.permute.xlu0 %823
        %841 = vst.msk [vmem:[#allocation3] sm:$0xf] %vm776, %v794
        %842 = vst.msk [vmem:[#allocation3 + $0x4] sm:$0xf] %vm776, %v796
        %843 = vst.msk [vmem:[#allocation3 + $0x8] sm:$0xf] %vm776, %v798
        %844 = vst.msk [vmem:[#allocation3 + $0xc] sm:$0xf] %vm776, %v800
        %845 = vst.msk [vmem:[#allocation3 + $0x10] sm:$0xf] %vm776, %v802
        %846 = vst.msk [vmem:[#allocation3 + $0x14] sm:$0xf] %vm776, %v804
        %847 = vst.msk [vmem:[#allocation3 + $0x18] sm:$0xf] %vm776, %v806
        %848 = vst.msk [vmem:[#allocation3 + $0x1c] sm:$0xf] %vm776, %v808
        %849 = vst.msk [vmem:[#allocation3 + $0x20] sm:$0xf] %vm776, %v810
        %850 = vst.msk [vmem:[#allocation3 + $0x24] sm:$0xf] %vm776, %v812
        %851 = vst.msk [vmem:[#allocation3 + $0x28] sm:$0xf] %vm776, %v814
        %852 = vst.msk [vmem:[#allocation3 + $0x2c] sm:$0xf] %vm776, %v816
        %853 = vst.msk [vmem:[#allocation3 + $0x30] sm:$0xf] %vm776, %v818
        %854 = vst.msk [vmem:[#allocation3 + $0x34] sm:$0xf] %vm776, %v820
        %855 = vst.msk [vmem:[#allocation3 + $0x38] sm:$0xf] %vm776, %v822
        %856 = vst.msk [vmem:[#allocation3 + $0x3c] sm:$0xf] %vm776, %v824
      $region72: #{tpu_custom_call.1} parent=67 // pred_fallthru
        _
      %v857 = vld [vmem:[%s456] sm:$0xff]
      %v858 = vld [vmem:[%s456 + $0x8] sm:$0xff]
      %v859 = vld [vmem:[%s456 + $0x10] sm:$0xff]
      %v860 = vld [vmem:[%s456 + $0x18] sm:$0xff]
      %v861 = vpack.c.bf16 %v858, %v857
      %v862 = vpack.c.bf16 %v860, %v859
      %v863 = vld [vmem:[%s2] sm:$0xf]
      %v864 = vld [vmem:[%s2 + $0x4] sm:$0xf]
      %v865 = vld [vmem:[%s2 + $0x8] sm:$0xf]
      %v866 = vld [vmem:[%s2 + $0xc] sm:$0xf]
      %v867 = vld [vmem:[%s3] sm:$0x1]
      %v869 = vlaneseq
      %v870 = vshrl.u32 %v869, 7
      %v871 = vsub.s32 0, %v870
      %v872 = vrot.slane %v867, %v871
      %v878 = vunpack.c.l.b16 %v863
      %v879 = vunpack.c.l.b16 %v864
      %v880 = vunpack.c.l.b16 %v865
      %v881 = vunpack.c.l.b16 %v866
      %v882 = vpack.c.b16 %v879, %v878
      %v883 = vpack.c.b16 %v881, %v880
      %vm886 = vcmask 261120
      %v888 = vsel %vm886, %v861, 0
      %v891 = vsel %vm886, %v862, 0
      %893 = vmatprep.subr.bf16.mxu0 0
      %894 = vmatpush1.bf16.msra.mxu0 0
      %895 = vmatprep.subr.bf16.mxu0 0
      %896 = vmatpush1.bf16.msra.mxu0 0
      %897 = vmatprep.subr.bf16.mxu0 0
      %898 = vmatpush1.bf16.msra.mxu0 0
      %899 = vmatprep.subr.bf16.mxu0 0
      %900 = vmatpush1.bf16.msra.mxu0 0
      %901 = vmatprep.subr.bf16.mxu0 0
      %902 = vmatpush1.bf16.msra.mxu0 0
      %903 = vmatprep.subr.bf16.mxu0 0
      %904 = vmatpush1.bf16.msra.mxu0 0
      %905 = vmatprep.subr.bf16.mxu0 0
      %906 = vmatpush1.bf16.msra.mxu0 %v883
      %907 = vmatprep.subr.bf16.mxu0 0
      %908 = vmatpush1.bf16.msra.mxu0 %v882
      %909 = vmatprep.subr.bf16.mxu0 0
      %910 = vmatpush2.bf16.msra.mxu0 0
      %911 = vmatprep.subr.bf16.mxu0 0
      %912 = vmatpush2.bf16.msra.mxu0 0
      %913 = vmatprep.subr.bf16.mxu0 0
      %914 = vmatpush2.bf16.msra.mxu0 0
      %915 = vmatprep.subr.bf16.mxu0 0
      %916 = vmatpush2.bf16.msra.mxu0 0
      %917 = vmatprep.subr.bf16.mxu0 0
      %918 = vmatpush2.bf16.msra.mxu0 0
      %919 = vmatprep.subr.bf16.mxu0 0
      %920 = vmatpush2.bf16.msra.mxu0 0
      %921 = vmatprep.subr.bf16.mxu0 0
      %922 = vmatpush2.bf16.msra.mxu0 0
      %923 = vmatprep.subr.bf16.mxu0 0
      %924 = vmatpush2.bf16.msra.mxu0 0
      %925 = vmatprep.mubr.bf16.mxu0 0
      %926 = vmatmul.mubr.bf16.gmra.mxu0 %v888
      %v927 = vpop.f32.mrf.mxu0
      %v928 = vadd.f32 %v872, %v927
      %v929 = vpop.f32.mrf.mxu0
      %v930 = vpop.f32.mrf.mxu0
      %v931 = vadd.f32 %v872, %v930
      %v932 = vpop.f32.mrf.mxu0
      %933 = vmatprep.mubr.bf16.mxu0 0
      %934 = vmatmul.mubr.bf16.gmra.mxu0 %v891
      %v935 = vpop.f32.mrf.mxu0
      %v936 = vadd.f32 %v872, %v935
      %v937 = vpop.f32.mrf.mxu0
      %v938 = vpop.f32.mrf.mxu0
      %v939 = vadd.f32 %v872, %v938
      %v940 = vpop.f32.mrf.mxu0
      %941 = vdwg.mxu0
      %v942 = vmul.f32 %v928, 0.5
      %v943 = vmul.f32 %v931, 0.5
      %v944 = vmul.f32 %v936, 0.5
      %v945 = vmul.f32 %v939, 0.5
      %v946 = vld [vmem:[%s10] sm:$0xf]
      %v947 = vld [vmem:[%s10 + $0x4] sm:$0xf]
      %v948 = vld [vmem:[%s10 + $0x8] sm:$0xf]
      %v949 = vld [vmem:[%s10 + $0xc] sm:$0xf]
      %v950 = vld [vmem:[%s11] sm:$0x1]
      %v951 = vpack.c.bf16 %v943, %v942
      %v952 = vpack.c.bf16 %v945, %v944
      %955 = vrot.lane.b32.xlu0 %v951, 124
      %v956 = vpop.permute.xlu0 %955
      %957 = vrot.lane.b32.xlu0 %v952, 124
      %v958 = vpop.permute.xlu0 %957
      %959 = vrot.lane.b32.xlu0 %v951, 120
      %v960 = vpop.permute.xlu0 %959
      %961 = vrot.lane.b32.xlu0 %v952, 120
      %v962 = vpop.permute.xlu0 %961
      %963 = vrot.lane.b32.xlu0 %v951, 116
      %v964 = vpop.permute.xlu0 %963
      %965 = vrot.lane.b32.xlu0 %v952, 116
      %v966 = vpop.permute.xlu0 %965
      %967 = vrot.lane.b32.xlu0 %v951, 112
      %v968 = vpop.permute.xlu0 %967
      %969 = vrot.lane.b32.xlu0 %v952, 112
      %v970 = vpop.permute.xlu0 %969
      %971 = vrot.lane.b32.xlu0 %v951, 108
      %v972 = vpop.permute.xlu0 %971
      %973 = vrot.lane.b32.xlu0 %v952, 108
      %v974 = vpop.permute.xlu0 %973
      %975 = vrot.lane.b32.xlu0 %v951, 104
      %v976 = vpop.permute.xlu0 %975
      %977 = vrot.lane.b32.xlu0 %v952, 104
      %v978 = vpop.permute.xlu0 %977
      %979 = vrot.lane.b32.xlu0 %v951, 100
      %v980 = vpop.permute.xlu0 %979
      %981 = vrot.lane.b32.xlu0 %v952, 100
      %v982 = vpop.permute.xlu0 %981
      %v983 = vld [vmem:[#allocation2] sm:$0xf]
      %v984 = vld [vmem:[#allocation2 + $0x4] sm:$0xf]
      %v985 = vld [vmem:[#allocation2 + $0x8] sm:$0xf]
      %v986 = vld [vmem:[#allocation2 + $0xc] sm:$0xf]
      %v987 = vld [vmem:[#allocation2 + $0x10] sm:$0xf]
      %v988 = vld [vmem:[#allocation2 + $0x14] sm:$0xf]
      %v989 = vld [vmem:[#allocation2 + $0x18] sm:$0xf]
      %v990 = vld [vmem:[#allocation2 + $0x1c] sm:$0xf]
      %v991 = vld [vmem:[#allocation2 + $0x20] sm:$0xf]
      %v992 = vld [vmem:[#allocation2 + $0x24] sm:$0xf]
      %v993 = vld [vmem:[#allocation2 + $0x28] sm:$0xf]
      %v994 = vld [vmem:[#allocation2 + $0x2c] sm:$0xf]
      %v995 = vld [vmem:[#allocation2 + $0x30] sm:$0xf]
      %v996 = vld [vmem:[#allocation2 + $0x34] sm:$0xf]
      %v997 = vld [vmem:[#allocation2 + $0x38] sm:$0xf]
      %v998 = vld [vmem:[#allocation2 + $0x3c] sm:$0xf]
      %v999 = vld [vmem:[#allocation3] sm:$0xf]
      %v1000 = vld [vmem:[#allocation3 + $0x4] sm:$0xf]
      %v1001 = vld [vmem:[#allocation3 + $0x8] sm:$0xf]
      %v1002 = vld [vmem:[#allocation3 + $0xc] sm:$0xf]
      %v1003 = vld [vmem:[#allocation3 + $0x10] sm:$0xf]
      %v1004 = vld [vmem:[#allocation3 + $0x14] sm:$0xf]
      %v1005 = vld [vmem:[#allocation3 + $0x18] sm:$0xf]
      %v1006 = vld [vmem:[#allocation3 + $0x1c] sm:$0xf]
      %v1007 = vld [vmem:[#allocation3 + $0x20] sm:$0xf]
      %v1008 = vld [vmem:[#allocation3 + $0x24] sm:$0xf]
      %v1009 = vld [vmem:[#allocation3 + $0x28] sm:$0xf]
      %v1010 = vld [vmem:[#allocation3 + $0x2c] sm:$0xf]
      %v1011 = vld [vmem:[#allocation3 + $0x30] sm:$0xf]
      %v1012 = vld [vmem:[#allocation3 + $0x34] sm:$0xf]
      %v1013 = vld [vmem:[#allocation3 + $0x38] sm:$0xf]
      %v1014 = vld [vmem:[#allocation3 + $0x3c] sm:$0xf]
      %v1017 = vunpack.c.l.b16 %v983
      %v1018 = vunpack.c.l.b16 %v984
      %v1019 = vpack.c.b16 %v1018, %v1017
      %vm1020 = vcmask 31744
      %v1022 = vsel %vm1020, %v951, 0
      %v1025 = vsel %vm1020, %v952, 0
      %v1028 = vsel %vm1020, %v1019, 0
      %1030 = vmatprep.subr.bf16.mxu0 0
      %1031 = vmatpush1.bf16.xpose.msra.mxu0 0
      %1032 = vmatprep.subr.bf16.mxu0 0
      %1033 = vmatpush1.bf16.xpose.msra.mxu0 0
      %1034 = vmatprep.subr.bf16.mxu0 0
      %1035 = vmatpush1.bf16.xpose.msra.mxu0 0
      %1036 = vmatprep.subr.bf16.mxu0 0
      %1037 = vmatpush1.bf16.xpose.msra.mxu0 0
      %1038 = vmatprep.subr.bf16.mxu0 0
      %1039 = vmatpush1.bf16.xpose.msra.mxu0 0
      %1040 = vmatprep.subr.bf16.mxu0 0
      %1041 = vmatpush1.bf16.xpose.msra.mxu0 0
      %1042 = vmatprep.subr.bf16.mxu0 0
      %1043 = vmatpush1.bf16.xpose.msra.mxu0 0
      %1044 = vmatprep.subr.bf16.mxu0 0
      %1045 = vmatpush1.bf16.xpose.msra.mxu0 %v1028
      %1046 = vmatprep.subr.bf16.mxu0 0
      %1047 = vmatpush2.bf16.xpose.msra.mxu0 0
      %1048 = vmatprep.subr.bf16.mxu0 0
      %1049 = vmatpush2.bf16.xpose.msra.mxu0 0
      %1050 = vmatprep.subr.bf16.mxu0 0
      %1051 = vmatpush2.bf16.xpose.msra.mxu0 0
      %1052 = vmatprep.subr.bf16.mxu0 0
      %1053 = vmatpush2.bf16.xpose.msra.mxu0 0
      %1054 = vmatprep.subr.bf16.mxu0 0
      %1055 = vmatpush2.bf16.xpose.msra.mxu0 0
      %1056 = vmatprep.subr.bf16.mxu0 0
      %1057 = vmatpush2.bf16.xpose.msra.mxu0 0
      %1058 = vmatprep.subr.bf16.mxu0 0
      %1059 = vmatpush2.bf16.xpose.msra.mxu0 0
      %1060 = vmatprep.subr.bf16.mxu0 0
      %1061 = vmatpush2.bf16.xpose.msra.mxu0 0
      %1062 = vmatprep.mubr.bf16.mxu0 0
      %1063 = vmatmul.mubr.bf16.gmra.mxu0 %v1022
      %v1064 = vpop.f32.mrf.mxu0
      %v1065 = vadd.f32 0.0, %v1064
      %v1066 = vpop.f32.mrf.mxu0
      %v1067 = vpop.f32.mrf.mxu0
      %v1068 = vadd.f32 0.0, %v1067
      %v1069 = vpop.f32.mrf.mxu0
      %1070 = vmatprep.mubr.bf16.mxu0 0
      %1071 = vmatmul.mubr.bf16.gmra.mxu0 %v1025
      %v1072 = vpop.f32.mrf.mxu0
      %v1073 = vadd.f32 0.0, %v1072
      %v1074 = vpop.f32.mrf.mxu0
      %v1075 = vpop.f32.mrf.mxu0
      %v1076 = vadd.f32 0.0, %v1075
      %v1077 = vpop.f32.mrf.mxu0
      %1078 = vdwg.mxu0
      %v1081 = vunpack.c.l.b16 %v985
      %v1082 = vunpack.c.l.b16 %v986
      %v1083 = vpack.c.b16 %v1082, %v1081
      %v1085 = vsel %vm1020, %v956, 0
      %v1088 = vsel %vm1020, %v958, 0
      %v1091 = vsel %vm1020, %v1083, 0
      %1093 = vmatprep.subr.bf16.mxu0 0
      %1094 = vmatpush1.bf16.xpose.msra.mxu0 0
      %1095 = vmatprep.subr.bf16.mxu0 0
      %1096 = vmatpush1.bf16.xpose.msra.mxu0 0
      %1097 = vmatprep.subr.bf16.mxu0 0
      %1098 = vmatpush1.bf16.xpose.msra.mxu0 0
      %1099 = vmatprep.subr.bf16.mxu0 0
      %1100 = vmatpush1.bf16.xpose.msra.mxu0 0
      %1101 = vmatprep.subr.bf16.mxu0 0
      %1102 = vmatpush1.bf16.xpose.msra.mxu0 0
      %1103 = vmatprep.subr.bf16.mxu0 0
      %1104 = vmatpush1.bf16.xpose.msra.mxu0 0
      %1105 = vmatprep.subr.bf16.mxu0 0
      %1106 = vmatpush1.bf16.xpose.msra.mxu0 0
      %1107 = vmatprep.subr.bf16.mxu0 0
      %1108 = vmatpush1.bf16.xpose.msra.mxu0 %v1091
      %1109 = vmatprep.subr.bf16.mxu0 0
      %1110 = vmatpush2.bf16.xpose.msra.mxu0 0
      %1111 = vmatprep.subr.bf16.mxu0 0
      %1112 = vmatpush2.bf16.xpose.msra.mxu0 0
      %1113 = vmatprep.subr.bf16.mxu0 0
      %1114 = vmatpush2.bf16.xpose.msra.mxu0 0
      %1115 = vmatprep.subr.bf16.mxu0 0
      %1116 = vmatpush2.bf16.xpose.msra.mxu0 0
      %1117 = vmatprep.subr.bf16.mxu0 0
      %1118 = vmatpush2.bf16.xpose.msra.mxu0 0
      %1119 = vmatprep.subr.bf16.mxu0 0
      %1120 = vmatpush2.bf16.xpose.msra.mxu0 0
      %1121 = vmatprep.subr.bf16.mxu0 0
      %1122 = vmatpush2.bf16.xpose.msra.mxu0 0
      %1123 = vmatprep.subr.bf16.mxu0 0
      %1124 = vmatpush2.bf16.xpose.msra.mxu0 0
      %1125 = vmatprep.mubr.bf16.mxu0 0
      %1126 = vmatmul.mubr.bf16.gmra.mxu0 %v1085
      %v1127 = vpop.f32.mrf.mxu0
      %v1128 = vadd.f32 0.0, %v1127
      %v1129 = vpop.f32.mrf.mxu0
      %v1130 = vpop.f32.mrf.mxu0
      %v1131 = vadd.f32 0.0, %v1130
      %v1132 = vpop.f32.mrf.mxu0
      %1133 = vmatprep.mubr.bf16.mxu0 0
      %1134 = vmatmul.mubr.bf16.gmra.mxu0 %v1088
      %v1135 = vpop.f32.mrf.mxu0
      %v1136 = vadd.f32 0.0, %v1135
      %v1137 = vpop.f32.mrf.mxu0
      %v1138 = vpop.f32.mrf.mxu0
      %v1139 = vadd.f32 0.0, %v1138
      %v1140 = vpop.f32.mrf.mxu0
      %1141 = vdwg.mxu0
      %v1144 = vunpack.c.l.b16 %v987
      %v1145 = vunpack.c.l.b16 %v988
      %v1146 = vpack.c.b16 %v1145, %v1144
      %v1148 = vsel %vm1020, %v960, 0
      %v1151 = vsel %vm1020, %v962, 0
      %v1154 = vsel %vm1020, %v1146, 0
      %1156 = vmatprep.subr.bf16.mxu0 0
      %1157 = vmatpush1.bf16.xpose.msra.mxu0 0
      %1158 = vmatprep.subr.bf16.mxu0 0
      %1159 = vmatpush1.bf16.xpose.msra.mxu0 0
      %1160 = vmatprep.subr.bf16.mxu0 0
      %1161 = vmatpush1.bf16.xpose.msra.mxu0 0
      %1162 = vmatprep.subr.bf16.mxu0 0
      %1163 = vmatpush1.bf16.xpose.msra.mxu0 0
      %1164 = vmatprep.subr.bf16.mxu0 0
      %1165 = vmatpush1.bf16.xpose.msra.mxu0 0
      %1166 = vmatprep.subr.bf16.mxu0 0
      %1167 = vmatpush1.bf16.xpose.msra.mxu0 0
      %1168 = vmatprep.subr.bf16.mxu0 0
      %1169 = vmatpush1.bf16.xpose.msra.mxu0 0
      %1170 = vmatprep.subr.bf16.mxu0 0
      %1171 = vmatpush1.bf16.xpose.msra.mxu0 %v1154
      %1172 = vmatprep.subr.bf16.mxu0 0
      %1173 = vmatpush2.bf16.xpose.msra.mxu0 0
      %1174 = vmatprep.subr.bf16.mxu0 0
      %1175 = vmatpush2.bf16.xpose.msra.mxu0 0
      %1176 = vmatprep.subr.bf16.mxu0 0
      %1177 = vmatpush2.bf16.xpose.msra.mxu0 0
      %1178 = vmatprep.subr.bf16.mxu0 0
      %1179 = vmatpush2.bf16.xpose.msra.mxu0 0
      %1180 = vmatprep.subr.bf16.mxu0 0
      %1181 = vmatpush2.bf16.xpose.msra.mxu0 0
      %1182 = vmatprep.subr.bf16.mxu0 0
      %1183 = vmatpush2.bf16.xpose.msra.mxu0 0
      %1184 = vmatprep.subr.bf16.mxu0 0
      %1185 = vmatpush2.bf16.xpose.msra.mxu0 0
      %1186 = vmatprep.subr.bf16.mxu0 0
      %1187 = vmatpush2.bf16.xpose.msra.mxu0 0
      %1188 = vmatprep.mubr.bf16.mxu0 0
      %1189 = vmatmul.mubr.bf16.gmra.mxu0 %v1148
      %v1190 = vpop.f32.mrf.mxu0
      %v1191 = vadd.f32 0.0, %v1190
      %v1192 = vpop.f32.mrf.mxu0
      %v1193 = vpop.f32.mrf.mxu0
      %v1194 = vadd.f32 0.0, %v1193
      %v1195 = vpop.f32.mrf.mxu0
      %1196 = vmatprep.mubr.bf16.mxu0 0
      %1197 = vmatmul.mubr.bf16.gmra.mxu0 %v1151
      %v1198 = vpop.f32.mrf.mxu0
      %v1199 = vadd.f32 0.0, %v1198
      %v1200 = vpop.f32.mrf.mxu0
      %v1201 = vpop.f32.mrf.mxu0
      %v1202 = vadd.f32 0.0, %v1201
      %v1203 = vpop.f32.mrf.mxu0
      %1204 = vdwg.mxu0
      %v1207 = vunpack.c.l.b16 %v989
      %v1208 = vunpack.c.l.b16 %v990
      %v1209 = vpack.c.b16 %v1208, %v1207
      %v1211 = vsel %vm1020, %v964, 0
      %v1214 = vsel %vm1020, %v966, 0
      %v1217 = vsel %vm1020, %v1209, 0
      %1219 = vmatprep.subr.bf16.mxu0 0
      %1220 = vmatpush1.bf16.xpose.msra.mxu0 0
      %1221 = vmatprep.subr.bf16.mxu0 0
      %1222 = vmatpush1.bf16.xpose.msra.mxu0 0
      %1223 = vmatprep.subr.bf16.mxu0 0
      %1224 = vmatpush1.bf16.xpose.msra.mxu0 0
      %1225 = vmatprep.subr.bf16.mxu0 0
      %1226 = vmatpush1.bf16.xpose.msra.mxu0 0
      %1227 = vmatprep.subr.bf16.mxu0 0
      %1228 = vmatpush1.bf16.xpose.msra.mxu0 0
      %1229 = vmatprep.subr.bf16.mxu0 0
      %1230 = vmatpush1.bf16.xpose.msra.mxu0 0
      %1231 = vmatprep.subr.bf16.mxu0 0
      %1232 = vmatpush1.bf16.xpose.msra.mxu0 0
      %1233 = vmatprep.subr.bf16.mxu0 0
      %1234 = vmatpush1.bf16.xpose.msra.mxu0 %v1217
      %1235 = vmatprep.subr.bf16.mxu0 0
      %1236 = vmatpush2.bf16.xpose.msra.mxu0 0
      %1237 = vmatprep.subr.bf16.mxu0 0
      %1238 = vmatpush2.bf16.xpose.msra.mxu0 0
      %1239 = vmatprep.subr.bf16.mxu0 0
      %1240 = vmatpush2.bf16.xpose.msra.mxu0 0
      %1241 = vmatprep.subr.bf16.mxu0 0
      %1242 = vmatpush2.bf16.xpose.msra.mxu0 0
      %1243 = vmatprep.subr.bf16.mxu0 0
      %1244 = vmatpush2.bf16.xpose.msra.mxu0 0
      %1245 = vmatprep.subr.bf16.mxu0 0
      %1246 = vmatpush2.bf16.xpose.msra.mxu0 0
      %1247 = vmatprep.subr.bf16.mxu0 0
      %1248 = vmatpush2.bf16.xpose.msra.mxu0 0
      %1249 = vmatprep.subr.bf16.mxu0 0
      %1250 = vmatpush2.bf16.xpose.msra.mxu0 0
      %1251 = vmatprep.mubr.bf16.mxu0 0
      %1252 = vmatmul.mubr.bf16.gmra.mxu0 %v1211
      %v1253 = vpop.f32.mrf.mxu0
      %v1254 = vadd.f32 0.0, %v1253
      %v1255 = vpop.f32.mrf.mxu0
      %v1256 = vpop.f32.mrf.mxu0
      %v1257 = vadd.f32 0.0, %v1256
      %v1258 = vpop.f32.mrf.mxu0
      %1259 = vmatprep.mubr.bf16.mxu0 0
      %1260 = vmatmul.mubr.bf16.gmra.mxu0 %v1214
      %v1261 = vpop.f32.mrf.mxu0
      %v1262 = vadd.f32 0.0, %v1261
      %v1263 = vpop.f32.mrf.mxu0
      %v1264 = vpop.f32.mrf.mxu0
      %v1265 = vadd.f32 0.0, %v1264
      %v1266 = vpop.f32.mrf.mxu0
      %1267 = vdwg.mxu0
      %v1270 = vunpack.c.l.b16 %v991
      %v1271 = vunpack.c.l.b16 %v992
      %v1272 = vpack.c.b16 %v1271, %v1270
      %v1274 = vsel %vm1020, %v968, 0
      %v1277 = vsel %vm1020, %v970, 0
      %v1280 = vsel %vm1020, %v1272, 0
      %1282 = vmatprep.subr.bf16.mxu0 0
      %1283 = vmatpush1.bf16.xpose.msra.mxu0 0
      %1284 = vmatprep.subr.bf16.mxu0 0
      %1285 = vmatpush1.bf16.xpose.msra.mxu0 0
      %1286 = vmatprep.subr.bf16.mxu0 0
      %1287 = vmatpush1.bf16.xpose.msra.mxu0 0
      %1288 = vmatprep.subr.bf16.mxu0 0
      %1289 = vmatpush1.bf16.xpose.msra.mxu0 0
      %1290 = vmatprep.subr.bf16.mxu0 0
      %1291 = vmatpush1.bf16.xpose.msra.mxu0 0
      %1292 = vmatprep.subr.bf16.mxu0 0
      %1293 = vmatpush1.bf16.xpose.msra.mxu0 0
      %1294 = vmatprep.subr.bf16.mxu0 0
      %1295 = vmatpush1.bf16.xpose.msra.mxu0 0
      %1296 = vmatprep.subr.bf16.mxu0 0
      %1297 = vmatpush1.bf16.xpose.msra.mxu0 %v1280
      %1298 = vmatprep.subr.bf16.mxu0 0
      %1299 = vmatpush2.bf16.xpose.msra.mxu0 0
      %1300 = vmatprep.subr.bf16.mxu0 0
      %1301 = vmatpush2.bf16.xpose.msra.mxu0 0
      %1302 = vmatprep.subr.bf16.mxu0 0
      %1303 = vmatpush2.bf16.xpose.msra.mxu0 0
      %1304 = vmatprep.subr.bf16.mxu0 0
      %1305 = vmatpush2.bf16.xpose.msra.mxu0 0
      %1306 = vmatprep.subr.bf16.mxu0 0
      %1307 = vmatpush2.bf16.xpose.msra.mxu0 0
      %1308 = vmatprep.subr.bf16.mxu0 0
      %1309 = vmatpush2.bf16.xpose.msra.mxu0 0
      %1310 = vmatprep.subr.bf16.mxu0 0
      %1311 = vmatpush2.bf16.xpose.msra.mxu0 0
      %1312 = vmatprep.subr.bf16.mxu0 0
      %1313 = vmatpush2.bf16.xpose.msra.mxu0 0
      %1314 = vmatprep.mubr.bf16.mxu0 0
      %1315 = vmatmul.mubr.bf16.gmra.mxu0 %v1274
      %v1316 = vpop.f32.mrf.mxu0
      %v1317 = vadd.f32 0.0, %v1316
      %v1318 = vpop.f32.mrf.mxu0
      %v1319 = vpop.f32.mrf.mxu0
      %v1320 = vadd.f32 0.0, %v1319
      %v1321 = vpop.f32.mrf.mxu0
      %1322 = vmatprep.mubr.bf16.mxu0 0
      %1323 = vmatmul.mubr.bf16.gmra.mxu0 %v1277
      %v1324 = vpop.f32.mrf.mxu0
      %v1325 = vadd.f32 0.0, %v1324
      %v1326 = vpop.f32.mrf.mxu0
      %v1327 = vpop.f32.mrf.mxu0
      %v1328 = vadd.f32 0.0, %v1327
      %v1329 = vpop.f32.mrf.mxu0
      %1330 = vdwg.mxu0
      %v1333 = vunpack.c.l.b16 %v993
      %v1334 = vunpack.c.l.b16 %v994
      %v1335 = vpack.c.b16 %v1334, %v1333
      %v1337 = vsel %vm1020, %v972, 0
      %v1340 = vsel %vm1020, %v974, 0
      %v1343 = vsel %vm1020, %v1335, 0
      %1345 = vmatprep.subr.bf16.mxu0 0
      %1346 = vmatpush1.bf16.xpose.msra.mxu0 0
      %1347 = vmatprep.subr.bf16.mxu0 0
      %1348 = vmatpush1.bf16.xpose.msra.mxu0 0
      %1349 = vmatprep.subr.bf16.mxu0 0
      %1350 = vmatpush1.bf16.xpose.msra.mxu0 0
      %1351 = vmatprep.subr.bf16.mxu0 0
      %1352 = vmatpush1.bf16.xpose.msra.mxu0 0
      %1353 = vmatprep.subr.bf16.mxu0 0
      %1354 = vmatpush1.bf16.xpose.msra.mxu0 0
      %1355 = vmatprep.subr.bf16.mxu0 0
      %1356 = vmatpush1.bf16.xpose.msra.mxu0 0
      %1357 = vmatprep.subr.bf16.mxu0 0
      %1358 = vmatpush1.bf16.xpose.msra.mxu0 0
      %1359 = vmatprep.subr.bf16.mxu0 0
      %1360 = vmatpush1.bf16.xpose.msra.mxu0 %v1343
      %1361 = vmatprep.subr.bf16.mxu0 0
      %1362 = vmatpush2.bf16.xpose.msra.mxu0 0
      %1363 = vmatprep.subr.bf16.mxu0 0
      %1364 = vmatpush2.bf16.xpose.msra.mxu0 0
      %1365 = vmatprep.subr.bf16.mxu0 0
      %1366 = vmatpush2.bf16.xpose.msra.mxu0 0
      %1367 = vmatprep.subr.bf16.mxu0 0
      %1368 = vmatpush2.bf16.xpose.msra.mxu0 0
      %1369 = vmatprep.subr.bf16.mxu0 0
      %1370 = vmatpush2.bf16.xpose.msra.mxu0 0
      %1371 = vmatprep.subr.bf16.mxu0 0
      %1372 = vmatpush2.bf16.xpose.msra.mxu0 0
      %1373 = vmatprep.subr.bf16.mxu0 0
      %1374 = vmatpush2.bf16.xpose.msra.mxu0 0
      %1375 = vmatprep.subr.bf16.mxu0 0
      %1376 = vmatpush2.bf16.xpose.msra.mxu0 0
      %1377 = vmatprep.mubr.bf16.mxu0 0
      %1378 = vmatmul.mubr.bf16.gmra.mxu0 %v1337
      %v1379 = vpop.f32.mrf.mxu0
      %v1380 = vadd.f32 0.0, %v1379
      %v1381 = vpop.f32.mrf.mxu0
      %v1382 = vpop.f32.mrf.mxu0
      %v1383 = vadd.f32 0.0, %v1382
      %v1384 = vpop.f32.mrf.mxu0
      %1385 = vmatprep.mubr.bf16.mxu0 0
      %1386 = vmatmul.mubr.bf16.gmra.mxu0 %v1340
      %v1387 = vpop.f32.mrf.mxu0
      %v1388 = vadd.f32 0.0, %v1387
      %v1389 = vpop.f32.mrf.mxu0
      %v1390 = vpop.f32.mrf.mxu0
      %v1391 = vadd.f32 0.0, %v1390
      %v1392 = vpop.f32.mrf.mxu0
      %1393 = vdwg.mxu0
      %v1396 = vunpack.c.l.b16 %v995
      %v1397 = vunpack.c.l.b16 %v996
      %v1398 = vpack.c.b16 %v1397, %v1396
      %v1400 = vsel %vm1020, %v976, 0
      %v1403 = vsel %vm1020, %v978, 0
      %v1406 = vsel %vm1020, %v1398, 0
      %1408 = vmatprep.subr.bf16.mxu0 0
      %1409 = vmatpush1.bf16.xpose.msra.mxu0 0
      %1410 = vmatprep.subr.bf16.mxu0 0
      %1411 = vmatpush1.bf16.xpose.msra.mxu0 0
      %1412 = vmatprep.subr.bf16.mxu0 0
      %1413 = vmatpush1.bf16.xpose.msra.mxu0 0
      %1414 = vmatprep.subr.bf16.mxu0 0
      %1415 = vmatpush1.bf16.xpose.msra.mxu0 0
      %1416 = vmatprep.subr.bf16.mxu0 0
      %1417 = vmatpush1.bf16.xpose.msra.mxu0 0
      %1418 = vmatprep.subr.bf16.mxu0 0
      %1419 = vmatpush1.bf16.xpose.msra.mxu0 0
      %1420 = vmatprep.subr.bf16.mxu0 0
      %1421 = vmatpush1.bf16.xpose.msra.mxu0 0
      %1422 = vmatprep.subr.bf16.mxu0 0
      %1423 = vmatpush1.bf16.xpose.msra.mxu0 %v1406
      %1424 = vmatprep.subr.bf16.mxu0 0
      %1425 = vmatpush2.bf16.xpose.msra.mxu0 0
      %1426 = vmatprep.subr.bf16.mxu0 0
      %1427 = vmatpush2.bf16.xpose.msra.mxu0 0
      %1428 = vmatprep.subr.bf16.mxu0 0
      %1429 = vmatpush2.bf16.xpose.msra.mxu0 0
      %1430 = vmatprep.subr.bf16.mxu0 0
      %1431 = vmatpush2.bf16.xpose.msra.mxu0 0
      %1432 = vmatprep.subr.bf16.mxu0 0
      %1433 = vmatpush2.bf16.xpose.msra.mxu0 0
      %1434 = vmatprep.subr.bf16.mxu0 0
      %1435 = vmatpush2.bf16.xpose.msra.mxu0 0
      %1436 = vmatprep.subr.bf16.mxu0 0
      %1437 = vmatpush2.bf16.xpose.msra.mxu0 0
      %1438 = vmatprep.subr.bf16.mxu0 0
      %1439 = vmatpush2.bf16.xpose.msra.mxu0 0
      %1440 = vmatprep.mubr.bf16.mxu0 0
      %1441 = vmatmul.mubr.bf16.gmra.mxu0 %v1400
      %v1442 = vpop.f32.mrf.mxu0
      %v1443 = vadd.f32 0.0, %v1442
      %v1444 = vpop.f32.mrf.mxu0
      %v1445 = vpop.f32.mrf.mxu0
      %v1446 = vadd.f32 0.0, %v1445
      %v1447 = vpop.f32.mrf.mxu0
      %1448 = vmatprep.mubr.bf16.mxu0 0
      %1449 = vmatmul.mubr.bf16.gmra.mxu0 %v1403
      %v1450 = vpop.f32.mrf.mxu0
      %v1451 = vadd.f32 0.0, %v1450
      %v1452 = vpop.f32.mrf.mxu0
      %v1453 = vpop.f32.mrf.mxu0
      %v1454 = vadd.f32 0.0, %v1453
      %v1455 = vpop.f32.mrf.mxu0
      %1456 = vdwg.mxu0
      %v1459 = vunpack.c.l.b16 %v997
      %v1460 = vunpack.c.l.b16 %v998
      %v1461 = vpack.c.b16 %v1460, %v1459
      %v1463 = vsel %vm1020, %v980, 0
      %v1466 = vsel %vm1020, %v982, 0
      %v1469 = vsel %vm1020, %v1461, 0
      %1471 = vmatprep.subr.bf16.mxu0 0
      %1472 = vmatpush1.bf16.xpose.msra.mxu0 0
      %1473 = vmatprep.subr.bf16.mxu0 0
      %1474 = vmatpush1.bf16.xpose.msra.mxu0 0
      %1475 = vmatprep.subr.bf16.mxu0 0
      %1476 = vmatpush1.bf16.xpose.msra.mxu0 0
      %1477 = vmatprep.subr.bf16.mxu0 0
      %1478 = vmatpush1.bf16.xpose.msra.mxu0 0
      %1479 = vmatprep.subr.bf16.mxu0 0
      %1480 = vmatpush1.bf16.xpose.msra.mxu0 0
      %1481 = vmatprep.subr.bf16.mxu0 0
      %1482 = vmatpush1.bf16.xpose.msra.mxu0 0
      %1483 = vmatprep.subr.bf16.mxu0 0
      %1484 = vmatpush1.bf16.xpose.msra.mxu0 0
      %1485 = vmatprep.subr.bf16.mxu0 0
      %1486 = vmatpush1.bf16.xpose.msra.mxu0 %v1469
      %1487 = vmatprep.subr.bf16.mxu0 0
      %1488 = vmatpush2.bf16.xpose.msra.mxu0 0
      %1489 = vmatprep.subr.bf16.mxu0 0
      %1490 = vmatpush2.bf16.xpose.msra.mxu0 0
      %1491 = vmatprep.subr.bf16.mxu0 0
      %1492 = vmatpush2.bf16.xpose.msra.mxu0 0
      %1493 = vmatprep.subr.bf16.mxu0 0
      %1494 = vmatpush2.bf16.xpose.msra.mxu0 0
      %1495 = vmatprep.subr.bf16.mxu0 0
      %1496 = vmatpush2.bf16.xpose.msra.mxu0 0
      %1497 = vmatprep.subr.bf16.mxu0 0
      %1498 = vmatpush2.bf16.xpose.msra.mxu0 0
      %1499 = vmatprep.subr.bf16.mxu0 0
      %1500 = vmatpush2.bf16.xpose.msra.mxu0 0
      %1501 = vmatprep.subr.bf16.mxu0 0
      %1502 = vmatpush2.bf16.xpose.msra.mxu0 0
      %1503 = vmatprep.mubr.bf16.mxu0 0
      %1504 = vmatmul.mubr.bf16.gmra.mxu0 %v1463
      %v1505 = vpop.f32.mrf.mxu0
      %v1506 = vadd.f32 0.0, %v1505
      %v1507 = vpop.f32.mrf.mxu0
      %v1508 = vpop.f32.mrf.mxu0
      %v1509 = vadd.f32 0.0, %v1508
      %v1510 = vpop.f32.mrf.mxu0
      %1511 = vmatprep.mubr.bf16.mxu0 0
      %1512 = vmatmul.mubr.bf16.gmra.mxu0 %v1466
      %v1513 = vpop.f32.mrf.mxu0
      %v1514 = vadd.f32 0.0, %v1513
      %v1515 = vpop.f32.mrf.mxu0
      %v1516 = vpop.f32.mrf.mxu0
      %v1517 = vadd.f32 0.0, %v1516
      %v1518 = vpop.f32.mrf.mxu0
      %1519 = vdwg.mxu0
      %vm1520 = vcmask 130048
      %v1521 = vsel %vm1520, %v1065, -inf
      %1522 = vmax.xlane.f32.xlu0 %v1521
      %v1523 = vpop.xlane.xlu0 %1522
      %v1524 = vsel %vm1520, %v1068, -inf
      %1525 = vmax.xlane.f32.xlu0 %v1524
      %v1526 = vpop.xlane.xlu0 %1525
      %v1527 = vsel %vm1520, %v1073, -inf
      %1528 = vmax.xlane.f32.xlu0 %v1527
      %v1529 = vpop.xlane.xlu0 %1528
      %v1530 = vsel %vm1520, %v1076, -inf
      %1531 = vmax.xlane.f32.xlu0 %v1530
      %v1532 = vpop.xlane.xlu0 %1531
      %v1533 = vsel %vm1520, %v1128, -inf
      %1534 = vmax.xlane.f32.xlu0 %v1533
      %v1535 = vpop.xlane.xlu0 %1534
      %v1536 = vsel %vm1520, %v1131, -inf
      %1537 = vmax.xlane.f32.xlu0 %v1536
      %v1538 = vpop.xlane.xlu0 %1537
      %v1539 = vsel %vm1520, %v1136, -inf
      %1540 = vmax.xlane.f32.xlu0 %v1539
      %v1541 = vpop.xlane.xlu0 %1540
      %v1542 = vsel %vm1520, %v1139, -inf
      %1543 = vmax.xlane.f32.xlu0 %v1542
      %v1544 = vpop.xlane.xlu0 %1543
      %v1545 = vsel %vm1520, %v1191, -inf
      %1546 = vmax.xlane.f32.xlu0 %v1545
      %v1547 = vpop.xlane.xlu0 %1546
      %v1548 = vsel %vm1520, %v1194, -inf
      %1549 = vmax.xlane.f32.xlu0 %v1548
      %v1550 = vpop.xlane.xlu0 %1549
      %v1551 = vsel %vm1520, %v1199, -inf
      %1552 = vmax.xlane.f32.xlu0 %v1551
      %v1553 = vpop.xlane.xlu0 %1552
      %v1554 = vsel %vm1520, %v1202, -inf
      %1555 = vmax.xlane.f32.xlu0 %v1554
      %v1556 = vpop.xlane.xlu0 %1555
      %v1557 = vsel %vm1520, %v1254, -inf
      %1558 = vmax.xlane.f32.xlu0 %v1557
      %v1559 = vpop.xlane.xlu0 %1558
      %v1560 = vsel %vm1520, %v1257, -inf
      %1561 = vmax.xlane.f32.xlu0 %v1560
      %v1562 = vpop.xlane.xlu0 %1561
      %v1563 = vsel %vm1520, %v1262, -inf
      %1564 = vmax.xlane.f32.xlu0 %v1563
      %v1565 = vpop.xlane.xlu0 %1564
      %v1566 = vsel %vm1520, %v1265, -inf
      %1567 = vmax.xlane.f32.xlu0 %v1566
      %v1568 = vpop.xlane.xlu0 %1567
      %v1569 = vsel %vm1520, %v1317, -inf
      %1570 = vmax.xlane.f32.xlu0 %v1569
      %v1571 = vpop.xlane.xlu0 %1570
      %v1572 = vsel %vm1520, %v1320, -inf
      %1573 = vmax.xlane.f32.xlu0 %v1572
      %v1574 = vpop.xlane.xlu0 %1573
      %v1575 = vsel %vm1520, %v1325, -inf
      %1576 = vmax.xlane.f32.xlu0 %v1575
      %v1577 = vpop.xlane.xlu0 %1576
      %v1578 = vsel %vm1520, %v1328, -inf
      %1579 = vmax.xlane.f32.xlu0 %v1578
      %v1580 = vpop.xlane.xlu0 %1579
      %v1581 = vsel %vm1520, %v1380, -inf
      %1582 = vmax.xlane.f32.xlu0 %v1581
      %v1583 = vpop.xlane.xlu0 %1582
      %v1584 = vsel %vm1520, %v1383, -inf
      %1585 = vmax.xlane.f32.xlu0 %v1584
      %v1586 = vpop.xlane.xlu0 %1585
      %v1587 = vsel %vm1520, %v1388, -inf
      %1588 = vmax.xlane.f32.xlu0 %v1587
      %v1589 = vpop.xlane.xlu0 %1588
      %v1590 = vsel %vm1520, %v1391, -inf
      %1591 = vmax.xlane.f32.xlu0 %v1590
      %v1592 = vpop.xlane.xlu0 %1591
      %v1593 = vsel %vm1520, %v1443, -inf
      %1594 = vmax.xlane.f32.xlu0 %v1593
      %v1595 = vpop.xlane.xlu0 %1594
      %v1596 = vsel %vm1520, %v1446, -inf
      %1597 = vmax.xlane.f32.xlu0 %v1596
      %v1598 = vpop.xlane.xlu0 %1597
      %v1599 = vsel %vm1520, %v1451, -inf
      %1600 = vmax.xlane.f32.xlu0 %v1599
      %v1601 = vpop.xlane.xlu0 %1600
      %v1602 = vsel %vm1520, %v1454, -inf
      %1603 = vmax.xlane.f32.xlu0 %v1602
      %v1604 = vpop.xlane.xlu0 %1603
      %v1605 = vsel %vm1520, %v1506, -inf
      %1606 = vmax.xlane.f32.xlu0 %v1605
      %v1607 = vpop.xlane.xlu0 %1606
      %v1608 = vsel %vm1520, %v1509, -inf
      %1609 = vmax.xlane.f32.xlu0 %v1608
      %v1610 = vpop.xlane.xlu0 %1609
      %v1611 = vsel %vm1520, %v1514, -inf
      %1612 = vmax.xlane.f32.xlu0 %v1611
      %v1613 = vpop.xlane.xlu0 %1612
      %v1614 = vsel %vm1520, %v1517, -inf
      %1615 = vmax.xlane.f32.xlu0 %v1614
      %v1616 = vpop.xlane.xlu0 %1615
      %v1617 = vsub.f32 %v1065, %v1523
      %v1618 = vsub.f32 %v1068, %v1526
      %v1619 = vsub.f32 %v1073, %v1529
      %v1620 = vsub.f32 %v1076, %v1532
      %v1621 = vsub.f32 %v1128, %v1535
      %v1622 = vsub.f32 %v1131, %v1538
      %v1623 = vsub.f32 %v1136, %v1541
      %v1624 = vsub.f32 %v1139, %v1544
      %v1625 = vsub.f32 %v1191, %v1547
      %v1626 = vsub.f32 %v1194, %v1550
      %v1627 = vsub.f32 %v1199, %v1553
      %v1628 = vsub.f32 %v1202, %v1556
      %v1629 = vsub.f32 %v1254, %v1559
      %v1630 = vsub.f32 %v1257, %v1562
      %v1631 = vsub.f32 %v1262, %v1565
      %v1632 = vsub.f32 %v1265, %v1568
      %v1633 = vsub.f32 %v1317, %v1571
      %v1634 = vsub.f32 %v1320, %v1574
      %v1635 = vsub.f32 %v1325, %v1577
      %v1636 = vsub.f32 %v1328, %v1580
      %v1637 = vsub.f32 %v1380, %v1583
      %v1638 = vsub.f32 %v1383, %v1586
      %v1639 = vsub.f32 %v1388, %v1589
      %v1640 = vsub.f32 %v1391, %v1592
      %v1641 = vsub.f32 %v1443, %v1595
      %v1642 = vsub.f32 %v1446, %v1598
      %v1643 = vsub.f32 %v1451, %v1601
      %v1644 = vsub.f32 %v1454, %v1604
      %v1645 = vsub.f32 %v1506, %v1607
      %v1646 = vsub.f32 %v1509, %v1610
      %v1647 = vsub.f32 %v1514, %v1613
      %v1648 = vsub.f32 %v1517, %v1616
      %v1649 = vmul.f32 %v1617, 1.442695
      %v1650 = vpow.pop %v1649
      %v1651 = vmul.f32 %v1618, 1.442695
      %v1652 = vpow.pop %v1651
      %v1653 = vmul.f32 %v1619, 1.442695
      %v1654 = vpow.pop %v1653
      %v1655 = vmul.f32 %v1620, 1.442695
      %v1656 = vpow.pop %v1655
      %v1657 = vmul.f32 %v1621, 1.442695
      %v1658 = vpow.pop %v1657
      %v1659 = vmul.f32 %v1622, 1.442695
      %v1660 = vpow.pop %v1659
      %v1661 = vmul.f32 %v1623, 1.442695
      %v1662 = vpow.pop %v1661
      %v1663 = vmul.f32 %v1624, 1.442695
      %v1664 = vpow.pop %v1663
      %v1665 = vmul.f32 %v1625, 1.442695
      %v1666 = vpow.pop %v1665
      %v1667 = vmul.f32 %v1626, 1.442695
      %v1668 = vpow.pop %v1667
      %v1669 = vmul.f32 %v1627, 1.442695
      %v1670 = vpow.pop %v1669
      %v1671 = vmul.f32 %v1628, 1.442695
      %v1672 = vpow.pop %v1671
      %v1673 = vmul.f32 %v1629, 1.442695
      %v1674 = vpow.pop %v1673
      %v1675 = vmul.f32 %v1630, 1.442695
      %v1676 = vpow.pop %v1675
      %v1677 = vmul.f32 %v1631, 1.442695
      %v1678 = vpow.pop %v1677
      %v1679 = vmul.f32 %v1632, 1.442695
      %v1680 = vpow.pop %v1679
      %v1681 = vmul.f32 %v1633, 1.442695
      %v1682 = vpow.pop %v1681
      %v1683 = vmul.f32 %v1634, 1.442695
      %v1684 = vpow.pop %v1683
      %v1685 = vmul.f32 %v1635, 1.442695
      %v1686 = vpow.pop %v1685
      %v1687 = vmul.f32 %v1636, 1.442695
      %v1688 = vpow.pop %v1687
      %v1689 = vmul.f32 %v1637, 1.442695
      %v1690 = vpow.pop %v1689
      %v1691 = vmul.f32 %v1638, 1.442695
      %v1692 = vpow.pop %v1691
      %v1693 = vmul.f32 %v1639, 1.442695
      %v1694 = vpow.pop %v1693
      %v1695 = vmul.f32 %v1640, 1.442695
      %v1696 = vpow.pop %v1695
      %v1697 = vmul.f32 %v1641, 1.442695
      %v1698 = vpow.pop %v1697
      %v1699 = vmul.f32 %v1642, 1.442695
      %v1700 = vpow.pop %v1699
      %v1701 = vmul.f32 %v1643, 1.442695
      %v1702 = vpow.pop %v1701
      %v1703 = vmul.f32 %v1644, 1.442695
      %v1704 = vpow.pop %v1703
      %v1705 = vmul.f32 %v1645, 1.442695
      %v1706 = vpow.pop %v1705
      %v1707 = vmul.f32 %v1646, 1.442695
      %v1708 = vpow.pop %v1707
      %v1709 = vmul.f32 %v1647, 1.442695
      %v1710 = vpow.pop %v1709
      %v1711 = vmul.f32 %v1648, 1.442695
      %v1712 = vpow.pop %v1711
      %v1713 = vsel %vm1520, %v1650, 0.0
      %1714 = vadd.xlane.f32.xlu0 %v1713
      %v1715 = vpop.xlane.xlu0 %1714
      %v1716 = vsel %vm1520, %v1652, 0.0
      %1717 = vadd.xlane.f32.xlu0 %v1716
      %v1718 = vpop.xlane.xlu0 %1717
      %v1719 = vsel %vm1520, %v1654, 0.0
      %1720 = vadd.xlane.f32.xlu0 %v1719
      %v1721 = vpop.xlane.xlu0 %1720
      %v1722 = vsel %vm1520, %v1656, 0.0
      %1723 = vadd.xlane.f32.xlu0 %v1722
      %v1724 = vpop.xlane.xlu0 %1723
      %v1725 = vsel %vm1520, %v1658, 0.0
      %1726 = vadd.xlane.f32.xlu0 %v1725
      %v1727 = vpop.xlane.xlu0 %1726
      %v1728 = vsel %vm1520, %v1660, 0.0
      %1729 = vadd.xlane.f32.xlu0 %v1728
      %v1730 = vpop.xlane.xlu0 %1729
      %v1731 = vsel %vm1520, %v1662, 0.0
      %1732 = vadd.xlane.f32.xlu0 %v1731
      %v1733 = vpop.xlane.xlu0 %1732
      %v1734 = vsel %vm1520, %v1664, 0.0
      %1735 = vadd.xlane.f32.xlu0 %v1734
      %v1736 = vpop.xlane.xlu0 %1735
      %v1737 = vsel %vm1520, %v1666, 0.0
      %1738 = vadd.xlane.f32.xlu0 %v1737
      %v1739 = vpop.xlane.xlu0 %1738
      %v1740 = vsel %vm1520, %v1668, 0.0
      %1741 = vadd.xlane.f32.xlu0 %v1740
      %v1742 = vpop.xlane.xlu0 %1741
      %v1743 = vsel %vm1520, %v1670, 0.0
      %1744 = vadd.xlane.f32.xlu0 %v1743
      %v1745 = vpop.xlane.xlu0 %1744
      %v1746 = vsel %vm1520, %v1672, 0.0
      %1747 = vadd.xlane.f32.xlu0 %v1746
      %v1748 = vpop.xlane.xlu0 %1747
      %v1749 = vsel %vm1520, %v1674, 0.0
      %1750 = vadd.xlane.f32.xlu0 %v1749
      %v1751 = vpop.xlane.xlu0 %1750
      %v1752 = vsel %vm1520, %v1676, 0.0
      %1753 = vadd.xlane.f32.xlu0 %v1752
      %v1754 = vpop.xlane.xlu0 %1753
      %v1755 = vsel %vm1520, %v1678, 0.0
      %1756 = vadd.xlane.f32.xlu0 %v1755
      %v1757 = vpop.xlane.xlu0 %1756
      %v1758 = vsel %vm1520, %v1680, 0.0
      %1759 = vadd.xlane.f32.xlu0 %v1758
      %v1760 = vpop.xlane.xlu0 %1759
      %v1761 = vsel %vm1520, %v1682, 0.0
      %1762 = vadd.xlane.f32.xlu0 %v1761
      %v1763 = vpop.xlane.xlu0 %1762
      %v1764 = vsel %vm1520, %v1684, 0.0
      %1765 = vadd.xlane.f32.xlu0 %v1764
      %v1766 = vpop.xlane.xlu0 %1765
      %v1767 = vsel %vm1520, %v1686, 0.0
      %1768 = vadd.xlane.f32.xlu0 %v1767
      %v1769 = vpop.xlane.xlu0 %1768
      %v1770 = vsel %vm1520, %v1688, 0.0
      %1771 = vadd.xlane.f32.xlu0 %v1770
      %v1772 = vpop.xlane.xlu0 %1771
      %v1773 = vsel %vm1520, %v1690, 0.0
      %1774 = vadd.xlane.f32.xlu0 %v1773
      %v1775 = vpop.xlane.xlu0 %1774
      %v1776 = vsel %vm1520, %v1692, 0.0
      %1777 = vadd.xlane.f32.xlu0 %v1776
      %v1778 = vpop.xlane.xlu0 %1777
      %v1779 = vsel %vm1520, %v1694, 0.0
      %1780 = vadd.xlane.f32.xlu0 %v1779
      %v1781 = vpop.xlane.xlu0 %1780
      %v1782 = vsel %vm1520, %v1696, 0.0
      %1783 = vadd.xlane.f32.xlu0 %v1782
      %v1784 = vpop.xlane.xlu0 %1783
      %v1785 = vsel %vm1520, %v1698, 0.0
      %1786 = vadd.xlane.f32.xlu0 %v1785
      %v1787 = vpop.xlane.xlu0 %1786
      %v1788 = vsel %vm1520, %v1700, 0.0
      %1789 = vadd.xlane.f32.xlu0 %v1788
      %v1790 = vpop.xlane.xlu0 %1789
      %v1791 = vsel %vm1520, %v1702, 0.0
      %1792 = vadd.xlane.f32.xlu0 %v1791
      %v1793 = vpop.xlane.xlu0 %1792
      %v1794 = vsel %vm1520, %v1704, 0.0
      %1795 = vadd.xlane.f32.xlu0 %v1794
      %v1796 = vpop.xlane.xlu0 %1795
      %v1797 = vsel %vm1520, %v1706, 0.0
      %1798 = vadd.xlane.f32.xlu0 %v1797
      %v1799 = vpop.xlane.xlu0 %1798
      %v1800 = vsel %vm1520, %v1708, 0.0
      %1801 = vadd.xlane.f32.xlu0 %v1800
      %v1802 = vpop.xlane.xlu0 %1801
      %v1803 = vsel %vm1520, %v1710, 0.0
      %1804 = vadd.xlane.f32.xlu0 %v1803
      %v1805 = vpop.xlane.xlu0 %1804
      %v1806 = vsel %vm1520, %v1712, 0.0
      %1807 = vadd.xlane.f32.xlu0 %v1806
      %v1808 = vpop.xlane.xlu0 %1807
      %v1809 = vrcp.pop %v1715
      %v1810 = vrcp.pop %v1718
      %v1811 = vrcp.pop %v1721
      %v1812 = vrcp.pop %v1724
      %v1813 = vrcp.pop %v1727
      %v1814 = vrcp.pop %v1730
      %v1815 = vrcp.pop %v1733
      %v1816 = vrcp.pop %v1736
      %v1817 = vrcp.pop %v1739
      %v1818 = vrcp.pop %v1742
      %v1819 = vrcp.pop %v1745
      %v1820 = vrcp.pop %v1748
      %v1821 = vrcp.pop %v1751
      %v1822 = vrcp.pop %v1754
      %v1823 = vrcp.pop %v1757
      %v1824 = vrcp.pop %v1760
      %v1825 = vrcp.pop %v1763
      %v1826 = vrcp.pop %v1766
      %v1827 = vrcp.pop %v1769
      %v1828 = vrcp.pop %v1772
      %v1829 = vrcp.pop %v1775
      %v1830 = vrcp.pop %v1778
      %v1831 = vrcp.pop %v1781
      %v1832 = vrcp.pop %v1784
      %v1833 = vrcp.pop %v1787
      %v1834 = vrcp.pop %v1790
      %v1835 = vrcp.pop %v1793
      %v1836 = vrcp.pop %v1796
      %v1837 = vrcp.pop %v1799
      %v1838 = vrcp.pop %v1802
      %v1839 = vrcp.pop %v1805
      %v1840 = vrcp.pop %v1808
      %v1841 = vmul.f32 %v1650, %v1809
      %v1842 = vmul.f32 %v1652, %v1810
      %v1843 = vmul.f32 %v1654, %v1811
      %v1844 = vmul.f32 %v1656, %v1812
      %v1845 = vmul.f32 %v1658, %v1813
      %v1846 = vmul.f32 %v1660, %v1814
      %v1847 = vmul.f32 %v1662, %v1815
      %v1848 = vmul.f32 %v1664, %v1816
      %v1849 = vmul.f32 %v1666, %v1817
      %v1850 = vmul.f32 %v1668, %v1818
      %v1851 = vmul.f32 %v1670, %v1819
      %v1852 = vmul.f32 %v1672, %v1820
      %v1853 = vmul.f32 %v1674, %v1821
      %v1854 = vmul.f32 %v1676, %v1822
      %v1855 = vmul.f32 %v1678, %v1823
      %v1856 = vmul.f32 %v1680, %v1824
      %v1857 = vmul.f32 %v1682, %v1825
      %v1858 = vmul.f32 %v1684, %v1826
      %v1859 = vmul.f32 %v1686, %v1827
      %v1860 = vmul.f32 %v1688, %v1828
      %v1861 = vmul.f32 %v1690, %v1829
      %v1862 = vmul.f32 %v1692, %v1830
      %v1863 = vmul.f32 %v1694, %v1831
      %v1864 = vmul.f32 %v1696, %v1832
      %v1865 = vmul.f32 %v1698, %v1833
      %v1866 = vmul.f32 %v1700, %v1834
      %v1867 = vmul.f32 %v1702, %v1835
      %v1868 = vmul.f32 %v1704, %v1836
      %v1869 = vmul.f32 %v1706, %v1837
      %v1870 = vmul.f32 %v1708, %v1838
      %v1871 = vmul.f32 %v1710, %v1839
      %v1872 = vmul.f32 %v1712, %v1840
      %v1873 = vpack.c.bf16 %v1842, %v1841
      %v1874 = vpack.c.bf16 %v1844, %v1843
      %v1875 = vpack.c.bf16 %v1846, %v1845
      %v1876 = vpack.c.bf16 %v1848, %v1847
      %v1877 = vpack.c.bf16 %v1850, %v1849
      %v1878 = vpack.c.bf16 %v1852, %v1851
      %v1879 = vpack.c.bf16 %v1854, %v1853
      %v1880 = vpack.c.bf16 %v1856, %v1855
      %v1881 = vpack.c.bf16 %v1858, %v1857
      %v1882 = vpack.c.bf16 %v1860, %v1859
      %v1883 = vpack.c.bf16 %v1862, %v1861
      %v1884 = vpack.c.bf16 %v1864, %v1863
      %v1885 = vpack.c.bf16 %v1866, %v1865
      %v1886 = vpack.c.bf16 %v1868, %v1867
      %v1887 = vpack.c.bf16 %v1870, %v1869
      %v1888 = vpack.c.bf16 %v1872, %v1871
      %v1891 = vunpack.c.l.b16 %v999
      %v1892 = vunpack.c.l.b16 %v1000
      %v1893 = vpack.c.b16 %v1892, %v1891
      %v1896 = vsel %vm1520, %v1873, 0
      %v1899 = vsel %vm1520, %v1874, 0
      %1901 = vmatprep.subr.bf16.mxu0 0
      %1902 = vmatpush1.bf16.msra.mxu0 0
      %1903 = vmatprep.subr.bf16.mxu0 0
      %1904 = vmatpush1.bf16.msra.mxu0 0
      %1905 = vmatprep.subr.bf16.mxu0 0
      %1906 = vmatpush1.bf16.msra.mxu0 0
      %1907 = vmatprep.subr.bf16.mxu0 0
      %1908 = vmatpush1.bf16.msra.mxu0 0
      %1909 = vmatprep.subr.bf16.mxu0 0
      %1910 = vmatpush1.bf16.msra.mxu0 0
      %1911 = vmatprep.subr.bf16.mxu0 0
      %1912 = vmatpush1.bf16.msra.mxu0 0
      %1913 = vmatprep.subr.bf16.mxu0 0
      %1914 = vmatpush1.bf16.msra.mxu0 0
      %1915 = vmatprep.subr.bf16.mxu0 0
      %1916 = vmatpush1.bf16.msra.mxu0 %v1893
      %1917 = vmatprep.subr.bf16.mxu0 0
      %1918 = vmatpush2.bf16.msra.mxu0 0
      %1919 = vmatprep.subr.bf16.mxu0 0
      %1920 = vmatpush2.bf16.msra.mxu0 0
      %1921 = vmatprep.subr.bf16.mxu0 0
      %1922 = vmatpush2.bf16.msra.mxu0 0
      %1923 = vmatprep.subr.bf16.mxu0 0
      %1924 = vmatpush2.bf16.msra.mxu0 0
      %1925 = vmatprep.subr.bf16.mxu0 0
      %1926 = vmatpush2.bf16.msra.mxu0 0
      %1927 = vmatprep.subr.bf16.mxu0 0
      %1928 = vmatpush2.bf16.msra.mxu0 0
      %1929 = vmatprep.subr.bf16.mxu0 0
      %1930 = vmatpush2.bf16.msra.mxu0 0
      %1931 = vmatprep.subr.bf16.mxu0 0
      %1932 = vmatpush2.bf16.msra.mxu0 0
      %1933 = vmatprep.mubr.bf16.mxu0 0
      %1934 = vmatmul.mubr.bf16.gmra.mxu0 %v1896
      %v1935 = vpop.f32.mrf.mxu0
      %v1936 = vadd.f32 0.0, %v1935
      %v1937 = vpop.f32.mrf.mxu0
      %v1938 = vpop.f32.mrf.mxu0
      %v1939 = vadd.f32 0.0, %v1938
      %v1940 = vpop.f32.mrf.mxu0
      %1941 = vmatprep.mubr.bf16.mxu0 0
      %1942 = vmatmul.mubr.bf16.gmra.mxu0 %v1899
      %v1943 = vpop.f32.mrf.mxu0
      %v1944 = vadd.f32 0.0, %v1943
      %v1945 = vpop.f32.mrf.mxu0
      %v1946 = vpop.f32.mrf.mxu0
      %v1947 = vadd.f32 0.0, %v1946
      %v1948 = vpop.f32.mrf.mxu0
      %1949 = vdwg.mxu0
      %v1952 = vunpack.c.l.b16 %v1001
      %v1953 = vunpack.c.l.b16 %v1002
      %v1954 = vpack.c.b16 %v1953, %v1952
      %v1957 = vsel %vm1520, %v1875, 0
      %v1960 = vsel %vm1520, %v1876, 0
      %1962 = vmatprep.subr.bf16.mxu0 0
      %1963 = vmatpush1.bf16.msra.mxu0 0
      %1964 = vmatprep.subr.bf16.mxu0 0
      %1965 = vmatpush1.bf16.msra.mxu0 0
      %1966 = vmatprep.subr.bf16.mxu0 0
      %1967 = vmatpush1.bf16.msra.mxu0 0
      %1968 = vmatprep.subr.bf16.mxu0 0
      %1969 = vmatpush1.bf16.msra.mxu0 0
      %1970 = vmatprep.subr.bf16.mxu0 0
      %1971 = vmatpush1.bf16.msra.mxu0 0
      %1972 = vmatprep.subr.bf16.mxu0 0
      %1973 = vmatpush1.bf16.msra.mxu0 0
      %1974 = vmatprep.subr.bf16.mxu0 0
      %1975 = vmatpush1.bf16.msra.mxu0 0
      %1976 = vmatprep.subr.bf16.mxu0 0
      %1977 = vmatpush1.bf16.msra.mxu0 %v1954
      %1978 = vmatprep.subr.bf16.mxu0 0
      %1979 = vmatpush2.bf16.msra.mxu0 0
      %1980 = vmatprep.subr.bf16.mxu0 0
      %1981 = vmatpush2.bf16.msra.mxu0 0
      %1982 = vmatprep.subr.bf16.mxu0 0
      %1983 = vmatpush2.bf16.msra.mxu0 0
      %1984 = vmatprep.subr.bf16.mxu0 0
      %1985 = vmatpush2.bf16.msra.mxu0 0
      %1986 = vmatprep.subr.bf16.mxu0 0
      %1987 = vmatpush2.bf16.msra.mxu0 0
      %1988 = vmatprep.subr.bf16.mxu0 0
      %1989 = vmatpush2.bf16.msra.mxu0 0
      %1990 = vmatprep.subr.bf16.mxu0 0
      %1991 = vmatpush2.bf16.msra.mxu0 0
      %1992 = vmatprep.subr.bf16.mxu0 0
      %1993 = vmatpush2.bf16.msra.mxu0 0
      %1994 = vmatprep.mubr.bf16.mxu0 0
      %1995 = vmatmul.mubr.bf16.gmra.mxu0 %v1957
      %v1996 = vpop.f32.mrf.mxu0
      %v1997 = vadd.f32 0.0, %v1996
      %v1998 = vpop.f32.mrf.mxu0
      %v1999 = vpop.f32.mrf.mxu0
      %v2000 = vadd.f32 0.0, %v1999
      %v2001 = vpop.f32.mrf.mxu0
      %2002 = vmatprep.mubr.bf16.mxu0 0
      %2003 = vmatmul.mubr.bf16.gmra.mxu0 %v1960
      %v2004 = vpop.f32.mrf.mxu0
      %v2005 = vadd.f32 0.0, %v2004
      %v2006 = vpop.f32.mrf.mxu0
      %v2007 = vpop.f32.mrf.mxu0
      %v2008 = vadd.f32 0.0, %v2007
      %v2009 = vpop.f32.mrf.mxu0
      %2010 = vdwg.mxu0
      %v2013 = vunpack.c.l.b16 %v1003
      %v2014 = vunpack.c.l.b16 %v1004
      %v2015 = vpack.c.b16 %v2014, %v2013
      %v2018 = vsel %vm1520, %v1877, 0
      %v2021 = vsel %vm1520, %v1878, 0
      %2023 = vmatprep.subr.bf16.mxu0 0
      %2024 = vmatpush1.bf16.msra.mxu0 0
      %2025 = vmatprep.subr.bf16.mxu0 0
      %2026 = vmatpush1.bf16.msra.mxu0 0
      %2027 = vmatprep.subr.bf16.mxu0 0
      %2028 = vmatpush1.bf16.msra.mxu0 0
      %2029 = vmatprep.subr.bf16.mxu0 0
      %2030 = vmatpush1.bf16.msra.mxu0 0
      %2031 = vmatprep.subr.bf16.mxu0 0
      %2032 = vmatpush1.bf16.msra.mxu0 0
      %2033 = vmatprep.subr.bf16.mxu0 0
      %2034 = vmatpush1.bf16.msra.mxu0 0
      %2035 = vmatprep.subr.bf16.mxu0 0
      %2036 = vmatpush1.bf16.msra.mxu0 0
      %2037 = vmatprep.subr.bf16.mxu0 0
      %2038 = vmatpush1.bf16.msra.mxu0 %v2015
      %2039 = vmatprep.subr.bf16.mxu0 0
      %2040 = vmatpush2.bf16.msra.mxu0 0
      %2041 = vmatprep.subr.bf16.mxu0 0
      %2042 = vmatpush2.bf16.msra.mxu0 0
      %2043 = vmatprep.subr.bf16.mxu0 0
      %2044 = vmatpush2.bf16.msra.mxu0 0
      %2045 = vmatprep.subr.bf16.mxu0 0
      %2046 = vmatpush2.bf16.msra.mxu0 0
      %2047 = vmatprep.subr.bf16.mxu0 0
      %2048 = vmatpush2.bf16.msra.mxu0 0
      %2049 = vmatprep.subr.bf16.mxu0 0
      %2050 = vmatpush2.bf16.msra.mxu0 0
      %2051 = vmatprep.subr.bf16.mxu0 0
      %2052 = vmatpush2.bf16.msra.mxu0 0
      %2053 = vmatprep.subr.bf16.mxu0 0
      %2054 = vmatpush2.bf16.msra.mxu0 0
      %2055 = vmatprep.mubr.bf16.mxu0 0
      %2056 = vmatmul.mubr.bf16.gmra.mxu0 %v2018
      %v2057 = vpop.f32.mrf.mxu0
      %v2058 = vadd.f32 0.0, %v2057
      %v2059 = vpop.f32.mrf.mxu0
      %v2060 = vpop.f32.mrf.mxu0
      %v2061 = vadd.f32 0.0, %v2060
      %v2062 = vpop.f32.mrf.mxu0
      %2063 = vmatprep.mubr.bf16.mxu0 0
      %2064 = vmatmul.mubr.bf16.gmra.mxu0 %v2021
      %v2065 = vpop.f32.mrf.mxu0
      %v2066 = vadd.f32 0.0, %v2065
      %v2067 = vpop.f32.mrf.mxu0
      %v2068 = vpop.f32.mrf.mxu0
      %v2069 = vadd.f32 0.0, %v2068
      %v2070 = vpop.f32.mrf.mxu0
      %2071 = vdwg.mxu0
      %v2074 = vunpack.c.l.b16 %v1005
      %v2075 = vunpack.c.l.b16 %v1006
      %v2076 = vpack.c.b16 %v2075, %v2074
      %v2079 = vsel %vm1520, %v1879, 0
      %v2082 = vsel %vm1520, %v1880, 0
      %2084 = vmatprep.subr.bf16.mxu0 0
      %2085 = vmatpush1.bf16.msra.mxu0 0
      %2086 = vmatprep.subr.bf16.mxu0 0
      %2087 = vmatpush1.bf16.msra.mxu0 0
      %2088 = vmatprep.subr.bf16.mxu0 0
      %2089 = vmatpush1.bf16.msra.mxu0 0
      %2090 = vmatprep.subr.bf16.mxu0 0
      %2091 = vmatpush1.bf16.msra.mxu0 0
      %2092 = vmatprep.subr.bf16.mxu0 0
      %2093 = vmatpush1.bf16.msra.mxu0 0
      %2094 = vmatprep.subr.bf16.mxu0 0
      %2095 = vmatpush1.bf16.msra.mxu0 0
      %2096 = vmatprep.subr.bf16.mxu0 0
      %2097 = vmatpush1.bf16.msra.mxu0 0
      %2098 = vmatprep.subr.bf16.mxu0 0
      %2099 = vmatpush1.bf16.msra.mxu0 %v2076
      %2100 = vmatprep.subr.bf16.mxu0 0
      %2101 = vmatpush2.bf16.msra.mxu0 0
      %2102 = vmatprep.subr.bf16.mxu0 0
      %2103 = vmatpush2.bf16.msra.mxu0 0
      %2104 = vmatprep.subr.bf16.mxu0 0
      %2105 = vmatpush2.bf16.msra.mxu0 0
      %2106 = vmatprep.subr.bf16.mxu0 0
      %2107 = vmatpush2.bf16.msra.mxu0 0
      %2108 = vmatprep.subr.bf16.mxu0 0
      %2109 = vmatpush2.bf16.msra.mxu0 0
      %2110 = vmatprep.subr.bf16.mxu0 0
      %2111 = vmatpush2.bf16.msra.mxu0 0
      %2112 = vmatprep.subr.bf16.mxu0 0
      %2113 = vmatpush2.bf16.msra.mxu0 0
      %2114 = vmatprep.subr.bf16.mxu0 0
      %2115 = vmatpush2.bf16.msra.mxu0 0
      %2116 = vmatprep.mubr.bf16.mxu0 0
      %2117 = vmatmul.mubr.bf16.gmra.mxu0 %v2079
      %v2118 = vpop.f32.mrf.mxu0
      %v2119 = vadd.f32 0.0, %v2118
      %v2120 = vpop.f32.mrf.mxu0
      %v2121 = vpop.f32.mrf.mxu0
      %v2122 = vadd.f32 0.0, %v2121
      %v2123 = vpop.f32.mrf.mxu0
      %2124 = vmatprep.mubr.bf16.mxu0 0
      %2125 = vmatmul.mubr.bf16.gmra.mxu0 %v2082
      %v2126 = vpop.f32.mrf.mxu0
      %v2127 = vadd.f32 0.0, %v2126
      %v2128 = vpop.f32.mrf.mxu0
      %v2129 = vpop.f32.mrf.mxu0
      %v2130 = vadd.f32 0.0, %v2129
      %v2131 = vpop.f32.mrf.mxu0
      %2132 = vdwg.mxu0
      %v2135 = vunpack.c.l.b16 %v1007
      %v2136 = vunpack.c.l.b16 %v1008
      %v2137 = vpack.c.b16 %v2136, %v2135
      %v2140 = vsel %vm1520, %v1881, 0
      %v2143 = vsel %vm1520, %v1882, 0
      %2145 = vmatprep.subr.bf16.mxu0 0
      %2146 = vmatpush1.bf16.msra.mxu0 0
      %2147 = vmatprep.subr.bf16.mxu0 0
      %2148 = vmatpush1.bf16.msra.mxu0 0
      %2149 = vmatprep.subr.bf16.mxu0 0
      %2150 = vmatpush1.bf16.msra.mxu0 0
      %2151 = vmatprep.subr.bf16.mxu0 0
      %2152 = vmatpush1.bf16.msra.mxu0 0
      %2153 = vmatprep.subr.bf16.mxu0 0
      %2154 = vmatpush1.bf16.msra.mxu0 0
      %2155 = vmatprep.subr.bf16.mxu0 0
      %2156 = vmatpush1.bf16.msra.mxu0 0
      %2157 = vmatprep.subr.bf16.mxu0 0
      %2158 = vmatpush1.bf16.msra.mxu0 0
      %2159 = vmatprep.subr.bf16.mxu0 0
      %2160 = vmatpush1.bf16.msra.mxu0 %v2137
      %2161 = vmatprep.subr.bf16.mxu0 0
      %2162 = vmatpush2.bf16.msra.mxu0 0
      %2163 = vmatprep.subr.bf16.mxu0 0
      %2164 = vmatpush2.bf16.msra.mxu0 0
      %2165 = vmatprep.subr.bf16.mxu0 0
      %2166 = vmatpush2.bf16.msra.mxu0 0
      %2167 = vmatprep.subr.bf16.mxu0 0
      %2168 = vmatpush2.bf16.msra.mxu0 0
      %2169 = vmatprep.subr.bf16.mxu0 0
      %2170 = vmatpush2.bf16.msra.mxu0 0
      %2171 = vmatprep.subr.bf16.mxu0 0
      %2172 = vmatpush2.bf16.msra.mxu0 0
      %2173 = vmatprep.subr.bf16.mxu0 0
      %2174 = vmatpush2.bf16.msra.mxu0 0
      %2175 = vmatprep.subr.bf16.mxu0 0
      %2176 = vmatpush2.bf16.msra.mxu0 0
      %2177 = vmatprep.mubr.bf16.mxu0 0
      %2178 = vmatmul.mubr.bf16.gmra.mxu0 %v2140
      %v2179 = vpop.f32.mrf.mxu0
      %v2180 = vadd.f32 0.0, %v2179
      %v2181 = vpop.f32.mrf.mxu0
      %v2182 = vpop.f32.mrf.mxu0
      %v2183 = vadd.f32 0.0, %v2182
      %v2184 = vpop.f32.mrf.mxu0
      %2185 = vmatprep.mubr.bf16.mxu0 0
      %2186 = vmatmul.mubr.bf16.gmra.mxu0 %v2143
      %v2187 = vpop.f32.mrf.mxu0
      %v2188 = vadd.f32 0.0, %v2187
      %v2189 = vpop.f32.mrf.mxu0
      %v2190 = vpop.f32.mrf.mxu0
      %v2191 = vadd.f32 0.0, %v2190
      %v2192 = vpop.f32.mrf.mxu0
      %2193 = vdwg.mxu0
      %v2196 = vunpack.c.l.b16 %v1009
      %v2197 = vunpack.c.l.b16 %v1010
      %v2198 = vpack.c.b16 %v2197, %v2196
      %v2201 = vsel %vm1520, %v1883, 0
      %v2204 = vsel %vm1520, %v1884, 0
      %2206 = vmatprep.subr.bf16.mxu0 0
      %2207 = vmatpush1.bf16.msra.mxu0 0
      %2208 = vmatprep.subr.bf16.mxu0 0
      %2209 = vmatpush1.bf16.msra.mxu0 0
      %2210 = vmatprep.subr.bf16.mxu0 0
      %2211 = vmatpush1.bf16.msra.mxu0 0
      %2212 = vmatprep.subr.bf16.mxu0 0
      %2213 = vmatpush1.bf16.msra.mxu0 0
      %2214 = vmatprep.subr.bf16.mxu0 0
      %2215 = vmatpush1.bf16.msra.mxu0 0
      %2216 = vmatprep.subr.bf16.mxu0 0
      %2217 = vmatpush1.bf16.msra.mxu0 0
      %2218 = vmatprep.subr.bf16.mxu0 0
      %2219 = vmatpush1.bf16.msra.mxu0 0
      %2220 = vmatprep.subr.bf16.mxu0 0
      %2221 = vmatpush1.bf16.msra.mxu0 %v2198
      %2222 = vmatprep.subr.bf16.mxu0 0
      %2223 = vmatpush2.bf16.msra.mxu0 0
      %2224 = vmatprep.subr.bf16.mxu0 0
      %2225 = vmatpush2.bf16.msra.mxu0 0
      %2226 = vmatprep.subr.bf16.mxu0 0
      %2227 = vmatpush2.bf16.msra.mxu0 0
      %2228 = vmatprep.subr.bf16.mxu0 0
      %2229 = vmatpush2.bf16.msra.mxu0 0
      %2230 = vmatprep.subr.bf16.mxu0 0
      %2231 = vmatpush2.bf16.msra.mxu0 0
      %2232 = vmatprep.subr.bf16.mxu0 0
      %2233 = vmatpush2.bf16.msra.mxu0 0
      %2234 = vmatprep.subr.bf16.mxu0 0
      %2235 = vmatpush2.bf16.msra.mxu0 0
      %2236 = vmatprep.subr.bf16.mxu0 0
      %2237 = vmatpush2.bf16.msra.mxu0 0
      %2238 = vmatprep.mubr.bf16.mxu0 0
      %2239 = vmatmul.mubr.bf16.gmra.mxu0 %v2201
      %v2240 = vpop.f32.mrf.mxu0
      %v2241 = vadd.f32 0.0, %v2240
      %v2242 = vpop.f32.mrf.mxu0
      %v2243 = vpop.f32.mrf.mxu0
      %v2244 = vadd.f32 0.0, %v2243
      %v2245 = vpop.f32.mrf.mxu0
      %2246 = vmatprep.mubr.bf16.mxu0 0
      %2247 = vmatmul.mubr.bf16.gmra.mxu0 %v2204
      %v2248 = vpop.f32.mrf.mxu0
      %v2249 = vadd.f32 0.0, %v2248
      %v2250 = vpop.f32.mrf.mxu0
      %v2251 = vpop.f32.mrf.mxu0
      %v2252 = vadd.f32 0.0, %v2251
      %v2253 = vpop.f32.mrf.mxu0
      %2254 = vdwg.mxu0
      %v2257 = vunpack.c.l.b16 %v1011
      %v2258 = vunpack.c.l.b16 %v1012
      %v2259 = vpack.c.b16 %v2258, %v2257
      %v2262 = vsel %vm1520, %v1885, 0
      %v2265 = vsel %vm1520, %v1886, 0
      %2267 = vmatprep.subr.bf16.mxu0 0
      %2268 = vmatpush1.bf16.msra.mxu0 0
      %2269 = vmatprep.subr.bf16.mxu0 0
      %2270 = vmatpush1.bf16.msra.mxu0 0
      %2271 = vmatprep.subr.bf16.mxu0 0
      %2272 = vmatpush1.bf16.msra.mxu0 0
      %2273 = vmatprep.subr.bf16.mxu0 0
      %2274 = vmatpush1.bf16.msra.mxu0 0
      %2275 = vmatprep.subr.bf16.mxu0 0
      %2276 = vmatpush1.bf16.msra.mxu0 0
      %2277 = vmatprep.subr.bf16.mxu0 0
      %2278 = vmatpush1.bf16.msra.mxu0 0
      %2279 = vmatprep.subr.bf16.mxu0 0
      %2280 = vmatpush1.bf16.msra.mxu0 0
      %2281 = vmatprep.subr.bf16.mxu0 0
      %2282 = vmatpush1.bf16.msra.mxu0 %v2259
      %2283 = vmatprep.subr.bf16.mxu0 0
      %2284 = vmatpush2.bf16.msra.mxu0 0
      %2285 = vmatprep.subr.bf16.mxu0 0
      %2286 = vmatpush2.bf16.msra.mxu0 0
      %2287 = vmatprep.subr.bf16.mxu0 0
      %2288 = vmatpush2.bf16.msra.mxu0 0
      %2289 = vmatprep.subr.bf16.mxu0 0
      %2290 = vmatpush2.bf16.msra.mxu0 0
      %2291 = vmatprep.subr.bf16.mxu0 0
      %2292 = vmatpush2.bf16.msra.mxu0 0
      %2293 = vmatprep.subr.bf16.mxu0 0
      %2294 = vmatpush2.bf16.msra.mxu0 0
      %2295 = vmatprep.subr.bf16.mxu0 0
      %2296 = vmatpush2.bf16.msra.mxu0 0
      %2297 = vmatprep.subr.bf16.mxu0 0
      %2298 = vmatpush2.bf16.msra.mxu0 0
      %2299 = vmatprep.mubr.bf16.mxu0 0
      %2300 = vmatmul.mubr.bf16.gmra.mxu0 %v2262
      %v2301 = vpop.f32.mrf.mxu0
      %v2302 = vadd.f32 0.0, %v2301
      %v2303 = vpop.f32.mrf.mxu0
      %v2304 = vpop.f32.mrf.mxu0
      %v2305 = vadd.f32 0.0, %v2304
      %v2306 = vpop.f32.mrf.mxu0
      %2307 = vmatprep.mubr.bf16.mxu0 0
      %2308 = vmatmul.mubr.bf16.gmra.mxu0 %v2265
      %v2309 = vpop.f32.mrf.mxu0
      %v2310 = vadd.f32 0.0, %v2309
      %v2311 = vpop.f32.mrf.mxu0
      %v2312 = vpop.f32.mrf.mxu0
      %v2313 = vadd.f32 0.0, %v2312
      %v2314 = vpop.f32.mrf.mxu0
      %2315 = vdwg.mxu0
      %v2318 = vunpack.c.l.b16 %v1013
      %v2319 = vunpack.c.l.b16 %v1014
      %v2320 = vpack.c.b16 %v2319, %v2318
      %v2323 = vsel %vm1520, %v1887, 0
      %v2326 = vsel %vm1520, %v1888, 0
      %2328 = vmatprep.subr.bf16.mxu0 0
      %2329 = vmatpush1.bf16.msra.mxu0 0
      %2330 = vmatprep.subr.bf16.mxu0 0
      %2331 = vmatpush1.bf16.msra.mxu0 0
      %2332 = vmatprep.subr.bf16.mxu0 0
      %2333 = vmatpush1.bf16.msra.mxu0 0
      %2334 = vmatprep.subr.bf16.mxu0 0
      %2335 = vmatpush1.bf16.msra.mxu0 0
      %2336 = vmatprep.subr.bf16.mxu0 0
      %2337 = vmatpush1.bf16.msra.mxu0 0
      %2338 = vmatprep.subr.bf16.mxu0 0
      %2339 = vmatpush1.bf16.msra.mxu0 0
      %2340 = vmatprep.subr.bf16.mxu0 0
      %2341 = vmatpush1.bf16.msra.mxu0 0
      %2342 = vmatprep.subr.bf16.mxu0 0
      %2343 = vmatpush1.bf16.msra.mxu0 %v2320
      %2344 = vmatprep.subr.bf16.mxu0 0
      %2345 = vmatpush2.bf16.msra.mxu0 0
      %2346 = vmatprep.subr.bf16.mxu0 0
      %2347 = vmatpush2.bf16.msra.mxu0 0
      %2348 = vmatprep.subr.bf16.mxu0 0
      %2349 = vmatpush2.bf16.msra.mxu0 0
      %2350 = vmatprep.subr.bf16.mxu0 0
      %2351 = vmatpush2.bf16.msra.mxu0 0
      %2352 = vmatprep.subr.bf16.mxu0 0
      %2353 = vmatpush2.bf16.msra.mxu0 0
      %2354 = vmatprep.subr.bf16.mxu0 0
      %2355 = vmatpush2.bf16.msra.mxu0 0
      %2356 = vmatprep.subr.bf16.mxu0 0
      %2357 = vmatpush2.bf16.msra.mxu0 0
      %2358 = vmatprep.subr.bf16.mxu0 0
      %2359 = vmatpush2.bf16.msra.mxu0 0
      %2360 = vmatprep.mubr.bf16.mxu0 0
      %2361 = vmatmul.mubr.bf16.gmra.mxu0 %v2323
      %v2362 = vpop.f32.mrf.mxu0
      %v2363 = vadd.f32 0.0, %v2362
      %v2364 = vpop.f32.mrf.mxu0
      %v2365 = vpop.f32.mrf.mxu0
      %v2366 = vadd.f32 0.0, %v2365
      %v2367 = vpop.f32.mrf.mxu0
      %2368 = vmatprep.mubr.bf16.mxu0 0
      %2369 = vmatmul.mubr.bf16.gmra.mxu0 %v2326
      %v2370 = vpop.f32.mrf.mxu0
      %v2371 = vadd.f32 0.0, %v2370
      %v2372 = vpop.f32.mrf.mxu0
      %v2373 = vpop.f32.mrf.mxu0
      %v2374 = vadd.f32 0.0, %v2373
      %v2375 = vpop.f32.mrf.mxu0
      %2376 = vdwg.mxu0
      %2381 = vrot.lane.b32.xlu0 %v1997, 4
      %v2382 = vpop.permute.xlu0 %2381
      %2383 = vrot.lane.b32.xlu0 %v2000, 4
      %v2384 = vpop.permute.xlu0 %2383
      %2385 = vrot.lane.b32.xlu0 %v2005, 4
      %v2386 = vpop.permute.xlu0 %2385
      %2387 = vrot.lane.b32.xlu0 %v2008, 4
      %v2388 = vpop.permute.xlu0 %2387
      %2397 = vrot.lane.b32.xlu0 %v2058, 8
      %v2398 = vpop.permute.xlu0 %2397
      %2399 = vrot.lane.b32.xlu0 %v2061, 8
      %v2400 = vpop.permute.xlu0 %2399
      %2401 = vrot.lane.b32.xlu0 %v2066, 8
      %v2402 = vpop.permute.xlu0 %2401
      %2403 = vrot.lane.b32.xlu0 %v2069, 8
      %v2404 = vpop.permute.xlu0 %2403
      %2413 = vrot.lane.b32.xlu0 %v2119, 12
      %v2414 = vpop.permute.xlu0 %2413
      %2415 = vrot.lane.b32.xlu0 %v2122, 12
      %v2416 = vpop.permute.xlu0 %2415
      %2417 = vrot.lane.b32.xlu0 %v2127, 12
      %v2418 = vpop.permute.xlu0 %2417
      %2419 = vrot.lane.b32.xlu0 %v2130, 12
      %v2420 = vpop.permute.xlu0 %2419
      %2429 = vrot.lane.b32.xlu0 %v2180, 16
      %v2430 = vpop.permute.xlu0 %2429
      %2431 = vrot.lane.b32.xlu0 %v2183, 16
      %v2432 = vpop.permute.xlu0 %2431
      %2433 = vrot.lane.b32.xlu0 %v2188, 16
      %v2434 = vpop.permute.xlu0 %2433
      %2435 = vrot.lane.b32.xlu0 %v2191, 16
      %v2436 = vpop.permute.xlu0 %2435
      %2445 = vrot.lane.b32.xlu0 %v2241, 20
      %v2446 = vpop.permute.xlu0 %2445
      %2447 = vrot.lane.b32.xlu0 %v2244, 20
      %v2448 = vpop.permute.xlu0 %2447
      %2449 = vrot.lane.b32.xlu0 %v2249, 20
      %v2450 = vpop.permute.xlu0 %2449
      %2451 = vrot.lane.b32.xlu0 %v2252, 20
      %v2452 = vpop.permute.xlu0 %2451
      %2461 = vrot.lane.b32.xlu0 %v2302, 24
      %v2462 = vpop.permute.xlu0 %2461
      %2463 = vrot.lane.b32.xlu0 %v2305, 24
      %v2464 = vpop.permute.xlu0 %2463
      %2465 = vrot.lane.b32.xlu0 %v2310, 24
      %v2466 = vpop.permute.xlu0 %2465
      %2467 = vrot.lane.b32.xlu0 %v2313, 24
      %v2468 = vpop.permute.xlu0 %2467
      %2477 = vrot.lane.b32.xlu0 %v2363, 28
      %v2478 = vpop.permute.xlu0 %2477
      %2479 = vrot.lane.b32.xlu0 %v2366, 28
      %v2480 = vpop.permute.xlu0 %2479
      %2481 = vrot.lane.b32.xlu0 %v2371, 28
      %v2482 = vpop.permute.xlu0 %2481
      %2483 = vrot.lane.b32.xlu0 %v2374, 28
      %v2484 = vpop.permute.xlu0 %2483
      %v2489 = vsel %vm1020, %v1936, %v2382
      %v2490 = vsel %vm1020, %v1939, %v2384
      %v2491 = vsel %vm1020, %v1944, %v2386
      %v2492 = vsel %vm1020, %v1947, %v2388
      %vm2493 = vcmask 64512
      %v2494 = vsel %vm2493, %v2489, %v2398
      %v2495 = vsel %vm2493, %v2490, %v2400
      %v2496 = vsel %vm2493, %v2491, %v2402
      %v2497 = vsel %vm2493, %v2492, %v2404
      %vm2498 = vcmask 97280
      %v2499 = vsel %vm2498, %v2494, %v2414
      %v2500 = vsel %vm2498, %v2495, %v2416
      %v2501 = vsel %vm2498, %v2496, %v2418
      %v2502 = vsel %vm2498, %v2497, %v2420
      %v2503 = vsel %vm1520, %v2499, %v2430
      %v2504 = vsel %vm1520, %v2500, %v2432
      %v2505 = vsel %vm1520, %v2501, %v2434
      %v2506 = vsel %vm1520, %v2502, %v2436
      %vm2507 = vcmask 162816
      %v2508 = vsel %vm2507, %v2503, %v2446
      %v2509 = vsel %vm2507, %v2504, %v2448
      %v2510 = vsel %vm2507, %v2505, %v2450
      %v2511 = vsel %vm2507, %v2506, %v2452
      %vm2512 = vcmask 195584
      %v2513 = vsel %vm2512, %v2508, %v2462
      %v2514 = vsel %vm2512, %v2509, %v2464
      %v2515 = vsel %vm2512, %v2510, %v2466
      %v2516 = vsel %vm2512, %v2511, %v2468
      %vm2517 = vcmask 228352
      %v2518 = vsel %vm2517, %v2513, %v2478
      %v2519 = vsel %vm2517, %v2514, %v2480
      %v2520 = vsel %vm2517, %v2515, %v2482
      %v2521 = vsel %vm2517, %v2516, %v2484
      %v2522 = vpack.c.bf16 %v2519, %v2518
      %v2523 = vpack.c.bf16 %v2521, %v2520
      %v2525 = vlaneseq
      %v2526 = vshrl.u32 %v2525, 7
      %v2527 = vsub.s32 0, %v2526
      %v2528 = vrot.slane %v950, %v2527
      %v2534 = vunpack.c.l.b16 %v946
      %v2535 = vunpack.c.l.b16 %v947
      %v2536 = vunpack.c.l.b16 %v948
      %v2537 = vunpack.c.l.b16 %v949
      %v2538 = vpack.c.b16 %v2535, %v2534
      %v2539 = vpack.c.b16 %v2537, %v2536
      %v2543 = vsel %vm886, %v2522, 0
      %v2546 = vsel %vm886, %v2523, 0
      %2548 = vmatprep.subr.bf16.mxu0 0
      %2549 = vmatpush1.bf16.msra.mxu0 0
      %2550 = vmatprep.subr.bf16.mxu0 0
      %2551 = vmatpush1.bf16.msra.mxu0 0
      %2552 = vmatprep.subr.bf16.mxu0 0
      %2553 = vmatpush1.bf16.msra.mxu0 0
      %2554 = vmatprep.subr.bf16.mxu0 0
      %2555 = vmatpush1.bf16.msra.mxu0 0
      %2556 = vmatprep.subr.bf16.mxu0 0
      %2557 = vmatpush1.bf16.msra.mxu0 0
      %2558 = vmatprep.subr.bf16.mxu0 0
      %2559 = vmatpush1.bf16.msra.mxu0 0
      %2560 = vmatprep.subr.bf16.mxu0 0
      %2561 = vmatpush1.bf16.msra.mxu0 %v2539
      %2562 = vmatprep.subr.bf16.mxu0 0
      %2563 = vmatpush1.bf16.msra.mxu0 %v2538
      %2564 = vmatprep.subr.bf16.mxu0 0
      %2565 = vmatpush2.bf16.msra.mxu0 0
      %2566 = vmatprep.subr.bf16.mxu0 0
      %2567 = vmatpush2.bf16.msra.mxu0 0
      %2568 = vmatprep.subr.bf16.mxu0 0
      %2569 = vmatpush2.bf16.msra.mxu0 0
      %2570 = vmatprep.subr.bf16.mxu0 0
      %2571 = vmatpush2.bf16.msra.mxu0 0
      %2572 = vmatprep.subr.bf16.mxu0 0
      %2573 = vmatpush2.bf16.msra.mxu0 0
      %2574 = vmatprep.subr.bf16.mxu0 0
      %2575 = vmatpush2.bf16.msra.mxu0 0
      %2576 = vmatprep.subr.bf16.mxu0 0
      %2577 = vmatpush2.bf16.msra.mxu0 0
      %2578 = vmatprep.subr.bf16.mxu0 0
      %2579 = vmatpush2.bf16.msra.mxu0 0
      %2580 = vmatprep.mubr.bf16.mxu0 0
      %2581 = vmatmul.mubr.bf16.gmra.mxu0 %v2543
      %v2582 = vpop.f32.mrf.mxu0
      %v2583 = vadd.f32 %v2528, %v2582
      %v2584 = vpop.f32.mrf.mxu0
      %v2585 = vpop.f32.mrf.mxu0
      %v2586 = vadd.f32 %v2528, %v2585
      %v2587 = vpop.f32.mrf.mxu0
      %2588 = vmatprep.mubr.bf16.mxu0 0
      %2589 = vmatmul.mubr.bf16.gmra.mxu0 %v2546
      %v2590 = vpop.f32.mrf.mxu0
      %v2591 = vadd.f32 %v2528, %v2590
      %v2592 = vpop.f32.mrf.mxu0
      %v2593 = vpop.f32.mrf.mxu0
      %v2594 = vadd.f32 %v2528, %v2593
      %v2595 = vpop.f32.mrf.mxu0
      %2596 = vdwg.mxu0
      %2597 = vst.msk [vmem:[%s471] sm:$0xff] %vm886, %v2583
      %2598 = vst.msk [vmem:[%s471 + $0x8] sm:$0xff] %vm886, %v2586
      %2599 = vst.msk [vmem:[%s471 + $0x10] sm:$0xff] %vm886, %v2591
      %2600 = vst.msk [vmem:[%s471 + $0x18] sm:$0xff] %vm886, %v2594
      %s2601 = smul.u32 4, %s28
      %p2602 = scmp.lt.s32.totalorder %s27, 1
      %s2603 = scalar_select %p2602, %s27, 1
      %p2604 = scmp.lt.s32.totalorder %s2601, 7
      %s2605 = scalar_select %p2604, %s2601, 7
      %s2606 = smul.addr %s2603, 8
      %s2607 = sadd.s32 %s2605, %s2606
      %s2608 = smul.addr %s2607, 8
      %s2609 = scalar_lea.vmem %s12, %s2608
      // Predicated region
      $region73: #{tpu_custom_call.1} parent=67 // pred_check
        %p2610 = pneg %p319
      $region74: #{tpu_custom_call.1} parent=67 // pred_check_branch
        %2612 = sbr.rel (%p2610) target = $region76
      $region75: #{tpu_custom_call.1} parent=67 // pred_region
        %s2613 = smul.u32 4, %s28
      $region76: #{tpu_custom_call.1} parent=67 // pred_fallthru
        _
    $region68: #{tpu_custom_call.1} parent=5 // pred_fallthru
      _
    %p2614 = scmp.le.s32.totalorder 2, %s18
    // Predicated region
    $region77: #{tpu_custom_call.1} parent=5 // pred_check
      %p2615 = pneg %p2614
    $region78: #{tpu_custom_call.1} parent=5 // pred_check_branch
      %2617 = sbr.rel (%p2615) target = $region80
    $region79: #{tpu_custom_call.1} parent=5 // pred_region
      %s2618 = ssub.s32 %s18, 2
      // Predicated region
      $region81: #{tpu_custom_call.1} parent=79 // pred_check
        %p2619 = pneg %p325
      $region82: #{tpu_custom_call.1} parent=79 // pred_check_branch
        %2621 = sbr.rel (%p2619) target = $region84
      $region83: #{tpu_custom_call.1} parent=79 // pred_region
        %s2622 = smul.u32 4, %s30
        %p2623 = scmp.lt.s32.totalorder %s29, 1
        %s2624 = scalar_select %p2623, %s29, 1
        %p2625 = scmp.lt.s32.totalorder %s2622, 7
        %s2626 = scalar_select %p2625, %s2622, 7
        %s2627 = smul.addr %s2624, 8
        %s2628 = sadd.s32 %s2626, %s2627
        %s2629 = smul.addr %s2628, 8
        %s2630 = scalar_lea.vmem %s12, %s2629
      $region84: #{tpu_custom_call.1} parent=79 // pred_fallthru
        _
    $region80: #{tpu_custom_call.1} parent=5 // pred_fallthru
      _
  $region6: #{tpu_custom_call.1} parent=0 // loop_footer
    %s22 = sadd.s32 1, %s18
  $region7: #{tpu_custom_call.1} parent=0 // loop_footer_branch
    %17 = sbr.rel target = $region3
  $region8: #{tpu_custom_call.1} parent=0 // loop_exit
    _

</llo_original>
